<compile_context>
chip_gen: v7x
topology: tpu7x:2x2x1
jax: 0.10.0
libtpu: 0.0.40
codegen_flags: <defaults>
</compile_context>

<pallas_src>
import jax
import jax.numpy as jnp
from jax.experimental import pallas as pl
from jax.experimental.pallas import tpu as pltpu


IN_C = 4
CONV_OC = 8
K = 3
STRIDE = 2
PAD = 1
HIDDEN = 32
NUM_ACTIONS = 6


# ---------------------------------------------------------------------------
# Fused Pallas kernel: conv(+ReLU) -> head(+ReLU) -> policy
# ---------------------------------------------------------------------------
def _fused_forward_kernel(patches_ref, wconv_ref, bconv_ref, wh_ref, bh_ref,
                          wp_ref, bp_ref, o_ref):
    """All stages fused; intermediates stay resident in vregs/VMEM.

    patches_ref: [B, CKK, S]   im2col patches, per-batch transposed (S on lanes)
    wconv_ref  : [OC, CKK]     conv weight (rows = output channels)
    bconv_ref  : [OC, 1]       conv bias (broadcast along lanes)
    wh_ref     : [OC, S, HID]  head weight pre-permuted so that
                               h_b = sum_oc feat_b[oc, :] @ wh[oc]
    bh_ref     : [1, HID]      head bias
    wp_ref     : [HID, A]      policy weight (pre-transposed, [in, out])
    bp_ref     : [1, A]        policy bias
    o_ref      : [B, A]        q values
    """
    B = patches_ref.shape[0]
    OC = wconv_ref.shape[0]

    wconv = wconv_ref[...]
    bconv = bconv_ref[...]

    h_rows = []
    for b in range(B):                      # B is tiny -> unrolled at trace time
        # Backbone conv as a lane-dense matmul: [OC, CKK] @ [CKK, S] -> [OC, S]
        conv = jnp.dot(wconv, patches_ref[b], preferred_element_type=jnp.float32)
        feat = jnp.maximum(conv + bconv, 0.0)          # ReLU, NCHW-ordered feat
        # Head: h_b = sum_oc feat[oc, :] @ wh[oc]  (== feat_flat @ head_w.T)
        acc = jnp.dot(feat[0:1, :], wh_ref[0], preferred_element_type=jnp.float32)
        for oc in range(1, OC):
            acc = acc + jnp.dot(feat[oc:oc + 1, :], wh_ref[oc],
                                preferred_element_type=jnp.float32)
        h_rows.append(acc)                  # [1, HID]

    h = jnp.maximum(jnp.concatenate(h_rows, axis=0) + bh_ref[...], 0.0)  # [B, HID]
    # pos_networks = [policy], neg_networks = []  =>  q = pos_outs = policy(h)
    q = jnp.dot(h, wp_ref[...], preferred_element_type=jnp.float32) + bp_ref[...]
    o_ref[...] = q


def fused_forward_pallas(patches, prep):
    B, CKK, S = patches.shape
    OC = prep["wconv"].shape[0]
    HID = prep["wh"].shape[2]
    A = prep["wp"].shape[1]
    return pl.pallas_call(
        _fused_forward_kernel,
        out_shape=jax.ShapeDtypeStruct((B, A), jnp.float32),
        grid=(1,),
        in_specs=[
            pl.BlockSpec((B, CKK, S), lambda i: (0, 0, 0)),
            pl.BlockSpec((OC, CKK), lambda i: (0, 0)),
            pl.BlockSpec((OC, 1), lambda i: (0, 0)),
            pl.BlockSpec((OC, S, HID), lambda i: (0, 0, 0)),
            pl.BlockSpec((1, HID), lambda i: (0, 0)),
            pl.BlockSpec((HID, A), lambda i: (0, 0)),
            pl.BlockSpec((1, A), lambda i: (0, 0)),
        ],
        out_specs=pl.BlockSpec((B, A), lambda i: (0, 0)),
        compiler_params=pltpu.CompilerParams(
            dimension_semantics=("arbitrary",)),
    )(patches, prep["wconv"], prep["bconv"], prep["wh"], prep["bh"],
      prep["wp"], prep["bp"])


# ---------------------------------------------------------------------------
# im2col glue (plain JAX, tiny; produces the kernel's per-batch [CKK, S] layout
# with NO runtime transpose — the final reshape only merges contiguous axes).
# ---------------------------------------------------------------------------
# TODO(synk): folding im2col into the kernel would need in-kernel strided
# spatial slicing; kept as cheap XLA glue on a 4 KiB input for robustness.
def im2col_nchw_t(x, kh, kw, stride, pad):
    """x: [B, C, H, W] -> patches [B, C*kh*kw, OH*OW] with row order (c, i, j)
    matching PyTorch Conv2d weight flattening and columns in (oh, ow) order."""
    B, C, H, W = x.shape
    xp = jnp.pad(x, ((0, 0), (0, 0), (pad, pad), (pad, pad)))
    OH = (H + 2 * pad - kh) // stride + 1
    OW = (W + 2 * pad - kw) // stride + 1
    cols = []
    for i in range(kh):
        for j in range(kw):
            cols.append(xp[:, :, i:i + stride * OH:stride, j:j + stride * OW:stride])
    patches = jnp.stack(cols, axis=2)                   # [B, C, kh*kw, OH, OW]
    patches = patches.reshape(B, C * kh * kw, OH * OW)  # contiguous merge only
    return patches, OH, OW


# ---------------------------------------------------------------------------
# Parameters: PyTorch layouts at init; one-time re-layout for the kernel.
# ---------------------------------------------------------------------------
def init_params(key, h=16, w=16):
    oh = (h + 2 * PAD - K) // STRIDE + 1
    ow = (w + 2 * PAD - K) // STRIDE + 1
    flat_dim = CONV_OC * oh * ow
    k1, k2, k3, k4, k5, k6 = jax.random.split(key, 6)
    return {
        # conv: PyTorch layout [OC, IC, kh, kw]
        "conv_w": jax.random.normal(k1, (CONV_OC, IN_C, K, K), jnp.float32) * 0.1,
        "conv_b": jax.random.normal(k2, (CONV_OC,), jnp.float32) * 0.01,
        # linears: PyTorch layout [out, in]
        "head_w": jax.random.normal(k3, (HIDDEN, flat_dim), jnp.float32) * 0.05,
        "head_b": jax.random.normal(k4, (HIDDEN,), jnp.float32) * 0.01,
        "policy_w": jax.random.normal(k5, (NUM_ACTIONS, HIDDEN), jnp.float32) * 0.05,
        "policy_b": jax.random.normal(k6, (NUM_ACTIONS,), jnp.float32) * 0.01,
    }


def prepare_params(params):
    """One-time weight re-layout (outside the jitted forward)."""
    OC, IC, kh, kw = params["conv_w"].shape
    HID, flat = params["head_w"].shape
    S = flat // OC
    A = params["policy_w"].shape[0]
    return {
        "wconv": params["conv_w"].reshape(OC, IC * kh * kw),            # [OC, CKK]
        "bconv": params["conv_b"].reshape(OC, 1),                       # [OC, 1]
        # head_w columns are the NCHW flatten (oc, s); permute to [OC, S, HID]
        "wh": jnp.transpose(params["head_w"].reshape(HID, OC, S), (1, 2, 0)),
        "bh": params["head_b"].reshape(1, HID),
        "wp": params["policy_w"].T,                                     # [HID, A]
        "bp": params["policy_b"].reshape(1, A),
    }


# ---------------------------------------------------------------------------
# Forward (matches PlasticityInjectionModel.forward at construction time)
# ---------------------------------------------------------------------------
@jax.jit
def plasticity_injection_forward(prep, x):
    """x: [B, C, H, W] float32 (NCHW). Returns (q, info) like the PyTorch module."""
    patches, _, _ = im2col_nchw_t(x, K, K, STRIDE, PAD)   # [B, CKK, S]
    q = fused_forward_pallas(patches, prep)               # [B, NUM_ACTIONS]
    # TODO(synk): plasticity_inject() / neg_networks (pos - neg) and copy_online
    # are training-time structural mutations; at construction neg_networks is
    # empty, so q == policy(head(backbone(x))) is exact.
    info = {"backbone": {}, "head": {}, "policy": {}}
    return q, info


def reference_forward(params, x):
    """Pure-JAX reference (PyTorch semantics) for a correctness check."""
    patches, _, _ = im2col_nchw_t(x, K, K, STRIDE, PAD)               # [B, CKK, S]
    wmat = params["conv_w"].reshape(CONV_OC, -1)
    conv = jnp.einsum("ok,bks->bos", wmat, patches) + params["conv_b"][None, :, None]
    feat = jnp.maximum(conv, 0.0).reshape(x.shape[0], -1)             # NCHW flatten
    h = jnp.maximum(feat @ params["head_w"].T + params["head_b"], 0.0)
    return h @ params["policy_w"].T + params["policy_b"]


if __name__ == "__main__":
    key = jax.random.PRNGKey(0)
    pkey, xkey = jax.random.split(key)

    B, C, H, W = 2, IN_C, 16, 16
    params = init_params(pkey, H, W)
    prep = prepare_params(params)            # one-time weight re-layout
    x = jax.random.normal(xkey, (B, C, H, W), jnp.float32)

    q, info = plasticity_injection_forward(prep, x)
    q = jax.block_until_ready(q)

    assert q.shape == (B, NUM_ACTIONS), q.shape
    assert q.dtype == jnp.float32
    assert bool(jnp.all(jnp.isfinite(q)))

    q_ref = reference_forward(params, x)
    assert bool(jnp.allclose(q, q_ref, rtol=1e-2, atol=1e-2)), (
        float(jnp.max(jnp.abs(q - q_ref))))

    print("KERNEL_OK")
</pallas_src>

<mosaic_0001>
module attributes {stable_mosaic.version = 11 : i64} {
  func.func @_fused_forward_kernel(%arg0: i32, %arg1: memref<2x36x64xf32, #tpu.memory_space<vmem>>, %arg2: memref<8x36xf32, #tpu.memory_space<vmem>>, %arg3: memref<8x1xf32, #tpu.memory_space<vmem>>, %arg4: memref<8x64x32xf32, #tpu.memory_space<vmem>>, %arg5: memref<1x32xf32, #tpu.memory_space<vmem>>, %arg6: memref<32x6xf32, #tpu.memory_space<vmem>>, %arg7: memref<1x6xf32, #tpu.memory_space<vmem>>, %arg8: memref<2x6xf32, #tpu.memory_space<vmem>>) attributes {dimension_semantics = [#tpu.dimension_semantics<arbitrary>], iteration_bounds = array<i64: 1>, scalar_prefetch = 0 : i64, scratch_operands = 0 : i64, tpu.core_type = #tpu.core_type<tc>, window_params = [{pipeline_mode = #tpu.pipeline_mode<synchronous>, transform_indices = @transform_0, window_bounds = array<i64: 2, 36, 64>}, {pipeline_mode = #tpu.pipeline_mode<synchronous>, transform_indices = @transform_1, window_bounds = array<i64: 8, 36>}, {pipeline_mode = #tpu.pipeline_mode<synchronous>, transform_indices = @transform_2, window_bounds = array<i64: 8, 1>}, {pipeline_mode = #tpu.pipeline_mode<synchronous>, transform_indices = @transform_3, window_bounds = array<i64: 8, 64, 32>}, {pipeline_mode = #tpu.pipeline_mode<synchronous>, transform_indices = @transform_4, window_bounds = array<i64: 1, 32>}, {pipeline_mode = #tpu.pipeline_mode<synchronous>, transform_indices = @transform_5, window_bounds = array<i64: 32, 6>}, {pipeline_mode = #tpu.pipeline_mode<synchronous>, transform_indices = @transform_6, window_bounds = array<i64: 1, 6>}, {pipeline_mode = #tpu.pipeline_mode<synchronous>, transform_indices = @transform_7, window_bounds = array<i64: 2, 6>}]} {
    %c0 = arith.constant 0 : index
    %c0_0 = arith.constant 0 : index
    %0 = vector.load %arg2[%c0, %c0_0] : memref<8x36xf32, #tpu.memory_space<vmem>>, vector<8x36xf32>
    %c0_1 = arith.constant 0 : index
    %c0_2 = arith.constant 0 : index
    %1 = vector.load %arg3[%c0_1, %c0_2] : memref<8x1xf32, #tpu.memory_space<vmem>>, vector<8x1xf32>
    %c0_3 = arith.constant 0 : index
    %c0_4 = arith.constant 0 : index
    %c0_5 = arith.constant 0 : index
    %2 = vector.load %arg1[%c0_3, %c0_4, %c0_5] : memref<2x36x64xf32, #tpu.memory_space<vmem>>, vector<1x36x64xf32>
    %3 = vector.shape_cast %2 : vector<1x36x64xf32> to vector<36x64xf32>
    %cst = arith.constant dense<0.000000e+00> : vector<8x64xf32>
    %4 = tpu.matmul %0, %3, %cst {dimension_numbers = #tpu.dot_dimension_numbers<[1], [0], [0], [1], [0, 0, 1, 1], [], []>} : vector<8x36xf32>, vector<36x64xf32>, vector<8x64xf32> -> vector<8x64xf32>
    %5 = vector.broadcast %1 : vector<8x1xf32> to vector<8x64xf32>
    %6 = arith.addf %4, %5 : vector<8x64xf32>
    %cst_6 = arith.constant 0.000000e+00 : f32
    %7 = vector.broadcast %cst_6 : f32 to vector<8x64xf32>
    %8 = arith.maximumf %6, %7 : vector<8x64xf32>
    %9 = vector.extract_strided_slice %8 {offsets = [0, 0], sizes = [1, 64], strides = [1, 1]} : vector<8x64xf32> to vector<1x64xf32>
    %c0_7 = arith.constant 0 : index
    %c0_8 = arith.constant 0 : index
    %c0_9 = arith.constant 0 : index
    %10 = vector.load %arg4[%c0_7, %c0_8, %c0_9] : memref<8x64x32xf32, #tpu.memory_space<vmem>>, vector<1x64x32xf32>
    %11 = vector.shape_cast %10 : vector<1x64x32xf32> to vector<64x32xf32>
    %cst_10 = arith.constant dense<0.000000e+00> : vector<1x32xf32>
    %12 = tpu.matmul %9, %11, %cst_10 {dimension_numbers = #tpu.dot_dimension_numbers<[1], [0], [0], [1], [0, 0, 1, 1], [], []>} : vector<1x64xf32>, vector<64x32xf32>, vector<1x32xf32> -> vector<1x32xf32>
    %13 = vector.extract_strided_slice %8 {offsets = [1, 0], sizes = [1, 64], strides = [1, 1]} : vector<8x64xf32> to vector<1x64xf32>
    %c1 = arith.constant 1 : index
    %c0_11 = arith.constant 0 : index
    %c0_12 = arith.constant 0 : index
    %14 = vector.load %arg4[%c1, %c0_11, %c0_12] : memref<8x64x32xf32, #tpu.memory_space<vmem>>, vector<1x64x32xf32>
    %15 = vector.shape_cast %14 : vector<1x64x32xf32> to vector<64x32xf32>
    %cst_13 = arith.constant dense<0.000000e+00> : vector<1x32xf32>
    %16 = tpu.matmul %13, %15, %cst_13 {dimension_numbers = #tpu.dot_dimension_numbers<[1], [0], [0], [1], [0, 0, 1, 1], [], []>} : vector<1x64xf32>, vector<64x32xf32>, vector<1x32xf32> -> vector<1x32xf32>
    %17 = arith.addf %12, %16 : vector<1x32xf32>
    %18 = vector.extract_strided_slice %8 {offsets = [2, 0], sizes = [1, 64], strides = [1, 1]} : vector<8x64xf32> to vector<1x64xf32>
    %c2 = arith.constant 2 : index
    %c0_14 = arith.constant 0 : index
    %c0_15 = arith.constant 0 : index
    %19 = vector.load %arg4[%c2, %c0_14, %c0_15] : memref<8x64x32xf32, #tpu.memory_space<vmem>>, vector<1x64x32xf32>
    %20 = vector.shape_cast %19 : vector<1x64x32xf32> to vector<64x32xf32>
    %cst_16 = arith.constant dense<0.000000e+00> : vector<1x32xf32>
    %21 = tpu.matmul %18, %20, %cst_16 {dimension_numbers = #tpu.dot_dimension_numbers<[1], [0], [0], [1], [0, 0, 1, 1], [], []>} : vector<1x64xf32>, vector<64x32xf32>, vector<1x32xf32> -> vector<1x32xf32>
    %22 = arith.addf %17, %21 : vector<1x32xf32>
    %23 = vector.extract_strided_slice %8 {offsets = [3, 0], sizes = [1, 64], strides = [1, 1]} : vector<8x64xf32> to vector<1x64xf32>
    %c3 = arith.constant 3 : index
    %c0_17 = arith.constant 0 : index
    %c0_18 = arith.constant 0 : index
    %24 = vector.load %arg4[%c3, %c0_17, %c0_18] : memref<8x64x32xf32, #tpu.memory_space<vmem>>, vector<1x64x32xf32>
    %25 = vector.shape_cast %24 : vector<1x64x32xf32> to vector<64x32xf32>
    %cst_19 = arith.constant dense<0.000000e+00> : vector<1x32xf32>
    %26 = tpu.matmul %23, %25, %cst_19 {dimension_numbers = #tpu.dot_dimension_numbers<[1], [0], [0], [1], [0, 0, 1, 1], [], []>} : vector<1x64xf32>, vector<64x32xf32>, vector<1x32xf32> -> vector<1x32xf32>
    %27 = arith.addf %22, %26 : vector<1x32xf32>
    %28 = vector.extract_strided_slice %8 {offsets = [4, 0], sizes = [1, 64], strides = [1, 1]} : vector<8x64xf32> to vector<1x64xf32>
    %c4 = arith.constant 4 : index
    %c0_20 = arith.constant 0 : index
    %c0_21 = arith.constant 0 : index
    %29 = vector.load %arg4[%c4, %c0_20, %c0_21] : memref<8x64x32xf32, #tpu.memory_space<vmem>>, vector<1x64x32xf32>
    %30 = vector.shape_cast %29 : vector<1x64x32xf32> to vector<64x32xf32>
    %cst_22 = arith.constant dense<0.000000e+00> : vector<1x32xf32>
    %31 = tpu.matmul %28, %30, %cst_22 {dimension_numbers = #tpu.dot_dimension_numbers<[1], [0], [0], [1], [0, 0, 1, 1], [], []>} : vector<1x64xf32>, vector<64x32xf32>, vector<1x32xf32> -> vector<1x32xf32>
    %32 = arith.addf %27, %31 : vector<1x32xf32>
    %33 = vector.extract_strided_slice %8 {offsets = [5, 0], sizes = [1, 64], strides = [1, 1]} : vector<8x64xf32> to vector<1x64xf32>
    %c5 = arith.constant 5 : index
    %c0_23 = arith.constant 0 : index
    %c0_24 = arith.constant 0 : index
    %34 = vector.load %arg4[%c5, %c0_23, %c0_24] : memref<8x64x32xf32, #tpu.memory_space<vmem>>, vector<1x64x32xf32>
    %35 = vector.shape_cast %34 : vector<1x64x32xf32> to vector<64x32xf32>
    %cst_25 = arith.constant dense<0.000000e+00> : vector<1x32xf32>
    %36 = tpu.matmul %33, %35, %cst_25 {dimension_numbers = #tpu.dot_dimension_numbers<[1], [0], [0], [1], [0, 0, 1, 1], [], []>} : vector<1x64xf32>, vector<64x32xf32>, vector<1x32xf32> -> vector<1x32xf32>
    %37 = arith.addf %32, %36 : vector<1x32xf32>
    %38 = vector.extract_strided_slice %8 {offsets = [6, 0], sizes = [1, 64], strides = [1, 1]} : vector<8x64xf32> to vector<1x64xf32>
    %c6 = arith.constant 6 : index
    %c0_26 = arith.constant 0 : index
    %c0_27 = arith.constant 0 : index
    %39 = vector.load %arg4[%c6, %c0_26, %c0_27] : memref<8x64x32xf32, #tpu.memory_space<vmem>>, vector<1x64x32xf32>
    %40 = vector.shape_cast %39 : vector<1x64x32xf32> to vector<64x32xf32>
    %cst_28 = arith.constant dense<0.000000e+00> : vector<1x32xf32>
    %41 = tpu.matmul %38, %40, %cst_28 {dimension_numbers = #tpu.dot_dimension_numbers<[1], [0], [0], [1], [0, 0, 1, 1], [], []>} : vector<1x64xf32>, vector<64x32xf32>, vector<1x32xf32> -> vector<1x32xf32>
    %42 = arith.addf %37, %41 : vector<1x32xf32>
    %43 = vector.extract_strided_slice %8 {offsets = [7, 0], sizes = [1, 64], strides = [1, 1]} : vector<8x64xf32> to vector<1x64xf32>
    %c7 = arith.constant 7 : index
    %c0_29 = arith.constant 0 : index
    %c0_30 = arith.constant 0 : index
    %44 = vector.load %arg4[%c7, %c0_29, %c0_30] : memref<8x64x32xf32, #tpu.memory_space<vmem>>, vector<1x64x32xf32>
    %45 = vector.shape_cast %44 : vector<1x64x32xf32> to vector<64x32xf32>
    %cst_31 = arith.constant dense<0.000000e+00> : vector<1x32xf32>
    %46 = tpu.matmul %43, %45, %cst_31 {dimension_numbers = #tpu.dot_dimension_numbers<[1], [0], [0], [1], [0, 0, 1, 1], [], []>} : vector<1x64xf32>, vector<64x32xf32>, vector<1x32xf32> -> vector<1x32xf32>
    %47 = arith.addf %42, %46 : vector<1x32xf32>
    %c1_32 = arith.constant 1 : index
    %c0_33 = arith.constant 0 : index
    %c0_34 = arith.constant 0 : index
    %48 = vector.load %arg1[%c1_32, %c0_33, %c0_34] : memref<2x36x64xf32, #tpu.memory_space<vmem>>, vector<1x36x64xf32>
    %49 = vector.shape_cast %48 : vector<1x36x64xf32> to vector<36x64xf32>
    %cst_35 = arith.constant dense<0.000000e+00> : vector<8x64xf32>
    %50 = tpu.matmul %0, %49, %cst_35 {dimension_numbers = #tpu.dot_dimension_numbers<[1], [0], [0], [1], [0, 0, 1, 1], [], []>} : vector<8x36xf32>, vector<36x64xf32>, vector<8x64xf32> -> vector<8x64xf32>
    %51 = vector.broadcast %1 : vector<8x1xf32> to vector<8x64xf32>
    %52 = arith.addf %50, %51 : vector<8x64xf32>
    %cst_36 = arith.constant 0.000000e+00 : f32
    %53 = vector.broadcast %cst_36 : f32 to vector<8x64xf32>
    %54 = arith.maximumf %52, %53 : vector<8x64xf32>
    %55 = vector.extract_strided_slice %54 {offsets = [0, 0], sizes = [1, 64], strides = [1, 1]} : vector<8x64xf32> to vector<1x64xf32>
    %c0_37 = arith.constant 0 : index
    %c0_38 = arith.constant 0 : index
    %c0_39 = arith.constant 0 : index
    %56 = vector.load %arg4[%c0_37, %c0_38, %c0_39] : memref<8x64x32xf32, #tpu.memory_space<vmem>>, vector<1x64x32xf32>
    %57 = vector.shape_cast %56 : vector<1x64x32xf32> to vector<64x32xf32>
    %cst_40 = arith.constant dense<0.000000e+00> : vector<1x32xf32>
    %58 = tpu.matmul %55, %57, %cst_40 {dimension_numbers = #tpu.dot_dimension_numbers<[1], [0], [0], [1], [0, 0, 1, 1], [], []>} : vector<1x64xf32>, vector<64x32xf32>, vector<1x32xf32> -> vector<1x32xf32>
    %59 = vector.extract_strided_slice %54 {offsets = [1, 0], sizes = [1, 64], strides = [1, 1]} : vector<8x64xf32> to vector<1x64xf32>
    %c1_41 = arith.constant 1 : index
    %c0_42 = arith.constant 0 : index
    %c0_43 = arith.constant 0 : index
    %60 = vector.load %arg4[%c1_41, %c0_42, %c0_43] : memref<8x64x32xf32, #tpu.memory_space<vmem>>, vector<1x64x32xf32>
    %61 = vector.shape_cast %60 : vector<1x64x32xf32> to vector<64x32xf32>
    %cst_44 = arith.constant dense<0.000000e+00> : vector<1x32xf32>
    %62 = tpu.matmul %59, %61, %cst_44 {dimension_numbers = #tpu.dot_dimension_numbers<[1], [0], [0], [1], [0, 0, 1, 1], [], []>} : vector<1x64xf32>, vector<64x32xf32>, vector<1x32xf32> -> vector<1x32xf32>
    %63 = arith.addf %58, %62 : vector<1x32xf32>
    %64 = vector.extract_strided_slice %54 {offsets = [2, 0], sizes = [1, 64], strides = [1, 1]} : vector<8x64xf32> to vector<1x64xf32>
    %c2_45 = arith.constant 2 : index
    %c0_46 = arith.constant 0 : index
    %c0_47 = arith.constant 0 : index
    %65 = vector.load %arg4[%c2_45, %c0_46, %c0_47] : memref<8x64x32xf32, #tpu.memory_space<vmem>>, vector<1x64x32xf32>
    %66 = vector.shape_cast %65 : vector<1x64x32xf32> to vector<64x32xf32>
    %cst_48 = arith.constant dense<0.000000e+00> : vector<1x32xf32>
    %67 = tpu.matmul %64, %66, %cst_48 {dimension_numbers = #tpu.dot_dimension_numbers<[1], [0], [0], [1], [0, 0, 1, 1], [], []>} : vector<1x64xf32>, vector<64x32xf32>, vector<1x32xf32> -> vector<1x32xf32>
    %68 = arith.addf %63, %67 : vector<1x32xf32>
    %69 = vector.extract_strided_slice %54 {offsets = [3, 0], sizes = [1, 64], strides = [1, 1]} : vector<8x64xf32> to vector<1x64xf32>
    %c3_49 = arith.constant 3 : index
    %c0_50 = arith.constant 0 : index
    %c0_51 = arith.constant 0 : index
    %70 = vector.load %arg4[%c3_49, %c0_50, %c0_51] : memref<8x64x32xf32, #tpu.memory_space<vmem>>, vector<1x64x32xf32>
    %71 = vector.shape_cast %70 : vector<1x64x32xf32> to vector<64x32xf32>
    %cst_52 = arith.constant dense<0.000000e+00> : vector<1x32xf32>
    %72 = tpu.matmul %69, %71, %cst_52 {dimension_numbers = #tpu.dot_dimension_numbers<[1], [0], [0], [1], [0, 0, 1, 1], [], []>} : vector<1x64xf32>, vector<64x32xf32>, vector<1x32xf32> -> vector<1x32xf32>
    %73 = arith.addf %68, %72 : vector<1x32xf32>
    %74 = vector.extract_strided_slice %54 {offsets = [4, 0], sizes = [1, 64], strides = [1, 1]} : vector<8x64xf32> to vector<1x64xf32>
    %c4_53 = arith.constant 4 : index
    %c0_54 = arith.constant 0 : index
    %c0_55 = arith.constant 0 : index
    %75 = vector.load %arg4[%c4_53, %c0_54, %c0_55] : memref<8x64x32xf32, #tpu.memory_space<vmem>>, vector<1x64x32xf32>
    %76 = vector.shape_cast %75 : vector<1x64x32xf32> to vector<64x32xf32>
    %cst_56 = arith.constant dense<0.000000e+00> : vector<1x32xf32>
    %77 = tpu.matmul %74, %76, %cst_56 {dimension_numbers = #tpu.dot_dimension_numbers<[1], [0], [0], [1], [0, 0, 1, 1], [], []>} : vector<1x64xf32>, vector<64x32xf32>, vector<1x32xf32> -> vector<1x32xf32>
    %78 = arith.addf %73, %77 : vector<1x32xf32>
    %79 = vector.extract_strided_slice %54 {offsets = [5, 0], sizes = [1, 64], strides = [1, 1]} : vector<8x64xf32> to vector<1x64xf32>
    %c5_57 = arith.constant 5 : index
    %c0_58 = arith.constant 0 : index
    %c0_59 = arith.constant 0 : index
    %80 = vector.load %arg4[%c5_57, %c0_58, %c0_59] : memref<8x64x32xf32, #tpu.memory_space<vmem>>, vector<1x64x32xf32>
    %81 = vector.shape_cast %80 : vector<1x64x32xf32> to vector<64x32xf32>
    %cst_60 = arith.constant dense<0.000000e+00> : vector<1x32xf32>
    %82 = tpu.matmul %79, %81, %cst_60 {dimension_numbers = #tpu.dot_dimension_numbers<[1], [0], [0], [1], [0, 0, 1, 1], [], []>} : vector<1x64xf32>, vector<64x32xf32>, vector<1x32xf32> -> vector<1x32xf32>
    %83 = arith.addf %78, %82 : vector<1x32xf32>
    %84 = vector.extract_strided_slice %54 {offsets = [6, 0], sizes = [1, 64], strides = [1, 1]} : vector<8x64xf32> to vector<1x64xf32>
    %c6_61 = arith.constant 6 : index
    %c0_62 = arith.constant 0 : index
    %c0_63 = arith.constant 0 : index
    %85 = vector.load %arg4[%c6_61, %c0_62, %c0_63] : memref<8x64x32xf32, #tpu.memory_space<vmem>>, vector<1x64x32xf32>
    %86 = vector.shape_cast %85 : vector<1x64x32xf32> to vector<64x32xf32>
    %cst_64 = arith.constant dense<0.000000e+00> : vector<1x32xf32>
    %87 = tpu.matmul %84, %86, %cst_64 {dimension_numbers = #tpu.dot_dimension_numbers<[1], [0], [0], [1], [0, 0, 1, 1], [], []>} : vector<1x64xf32>, vector<64x32xf32>, vector<1x32xf32> -> vector<1x32xf32>
    %88 = arith.addf %83, %87 : vector<1x32xf32>
    %89 = vector.extract_strided_slice %54 {offsets = [7, 0], sizes = [1, 64], strides = [1, 1]} : vector<8x64xf32> to vector<1x64xf32>
    %c7_65 = arith.constant 7 : index
    %c0_66 = arith.constant 0 : index
    %c0_67 = arith.constant 0 : index
    %90 = vector.load %arg4[%c7_65, %c0_66, %c0_67] : memref<8x64x32xf32, #tpu.memory_space<vmem>>, vector<1x64x32xf32>
    %91 = vector.shape_cast %90 : vector<1x64x32xf32> to vector<64x32xf32>
    %cst_68 = arith.constant dense<0.000000e+00> : vector<1x32xf32>
    %92 = tpu.matmul %89, %91, %cst_68 {dimension_numbers = #tpu.dot_dimension_numbers<[1], [0], [0], [1], [0, 0, 1, 1], [], []>} : vector<1x64xf32>, vector<64x32xf32>, vector<1x32xf32> -> vector<1x32xf32>
    %93 = arith.addf %88, %92 : vector<1x32xf32>
    %94 = tpu.concatenate %47, %93 in 0 : vector<1x32xf32>, vector<1x32xf32> -> vector<2x32xf32>
    %c0_69 = arith.constant 0 : index
    %c0_70 = arith.constant 0 : index
    %95 = vector.load %arg5[%c0_69, %c0_70] : memref<1x32xf32, #tpu.memory_space<vmem>>, vector<1x32xf32>
    %96 = vector.broadcast %95 : vector<1x32xf32> to vector<2x32xf32>
    %97 = arith.addf %94, %96 : vector<2x32xf32>
    %cst_71 = arith.constant 0.000000e+00 : f32
    %98 = vector.broadcast %cst_71 : f32 to vector<2x32xf32>
    %99 = arith.maximumf %97, %98 : vector<2x32xf32>
    %c0_72 = arith.constant 0 : index
    %c0_73 = arith.constant 0 : index
    %100 = vector.load %arg6[%c0_72, %c0_73] : memref<32x6xf32, #tpu.memory_space<vmem>>, vector<32x6xf32>
    %cst_74 = arith.constant dense<0.000000e+00> : vector<2x6xf32>
    %101 = tpu.matmul %99, %100, %cst_74 {dimension_numbers = #tpu.dot_dimension_numbers<[1], [0], [0], [1], [0, 0, 1, 1], [], []>} : vector<2x32xf32>, vector<32x6xf32>, vector<2x6xf32> -> vector<2x6xf32>
    %c0_75 = arith.constant 0 : index
    %c0_76 = arith.constant 0 : index
    %102 = vector.load %arg7[%c0_75, %c0_76] : memref<1x6xf32, #tpu.memory_space<vmem>>, vector<1x6xf32>
    %103 = vector.broadcast %102 : vector<1x6xf32> to vector<2x6xf32>
    %104 = arith.addf %101, %103 : vector<2x6xf32>
    %c0_77 = arith.constant 0 : index
    %c0_78 = arith.constant 0 : index
    %105 = vector.load %arg8[%c0_77, %c0_78] : memref<2x6xf32, #tpu.memory_space<vmem>>, vector<2x6xf32>
    tpu.vector_store %arg8[%c0_77, %c0_78], %104 {strides = array<i32>} : memref<2x6xf32, #tpu.memory_space<vmem>>, vector<2x6xf32>,
    return
  }
  func.func @transform_0(%arg0: i32) -> (i32, i32, i32) {
    %c0_i32 = arith.constant 0 : i32
    %c0_i32_0 = arith.constant 0 : i32
    %c0_i32_1 = arith.constant 0 : i32
    %c0_i32_2 = arith.constant 0 : i32
    return %c0_i32, %c0_i32_0, %c0_i32_1 : i32, i32, i32
  }
  func.func @transform_1(%arg0: i32) -> (i32, i32) {
    %c0_i32 = arith.constant 0 : i32
    %c0_i32_0 = arith.constant 0 : i32
    %c0_i32_1 = arith.constant 0 : i32
    return %c0_i32, %c0_i32_0 : i32, i32
  }
  func.func @transform_2(%arg0: i32) -> (i32, i32) {
    %c0_i32 = arith.constant 0 : i32
    %c0_i32_0 = arith.constant 0 : i32
    %c0_i32_1 = arith.constant 0 : i32
    return %c0_i32, %c0_i32_0 : i32, i32
  }
  func.func @transform_3(%arg0: i32) -> (i32, i32, i32) {
    %c0_i32 = arith.constant 0 : i32
    %c0_i32_0 = arith.constant 0 : i32
    %c0_i32_1 = arith.constant 0 : i32
    %c0_i32_2 = arith.constant 0 : i32
    return %c0_i32, %c0_i32_0, %c0_i32_1 : i32, i32, i32
  }
  func.func @transform_4(%arg0: i32) -> (i32, i32) {
    %c0_i32 = arith.constant 0 : i32
    %c0_i32_0 = arith.constant 0 : i32
    %c0_i32_1 = arith.constant 0 : i32
    return %c0_i32, %c0_i32_0 : i32, i32
  }
  func.func @transform_5(%arg0: i32) -> (i32, i32) {
    %c0_i32 = arith.constant 0 : i32
    %c0_i32_0 = arith.constant 0 : i32
    %c0_i32_1 = arith.constant 0 : i32
    return %c0_i32, %c0_i32_0 : i32, i32
  }
  func.func @transform_6(%arg0: i32) -> (i32, i32) {
    %c0_i32 = arith.constant 0 : i32
    %c0_i32_0 = arith.constant 0 : i32
    %c0_i32_1 = arith.constant 0 : i32
    return %c0_i32, %c0_i32_0 : i32, i32
  }
  func.func @transform_7(%arg0: i32) -> (i32, i32) {
    %c0_i32 = arith.constant 0 : i32
    %c0_i32_0 = arith.constant 0 : i32
    %c0_i32_1 = arith.constant 0 : i32
    return %c0_i32, %c0_i32_0 : i32, i32
  }
}

</mosaic_0001>

<llo_original>
// kernel: plasticity_injection_forward.1
$region0: #{plasticity_injection_forward.1}
  #allocation0 [shape = 'u32[]', space=smem, size = 0x4, offset = 0x4, fixed_abs, tag = 'smem constant byte address 0x4 - core index']
  #allocation1 [shape = 'u32[144,128]{1,0:T(1,128)}', space=vmem, size = 0x12000, scoped, tag = 'internal scratch']
  %s0 = inlined_call_operand.vmem [shape: f32[2,36,64], index: 0, kind: input, shape index: {}]
  %s1 = inlined_call_operand.vmem [shape: f32[8,36], index: 1, kind: input, shape index: {}]
  %s2 = inlined_call_operand.vmem [shape: f32[8,1], index: 2, kind: input, shape index: {}]
  %s3 = inlined_call_operand.vmem [shape: f32[8,64,32], index: 3, kind: input, shape index: {}]
  %s4 = inlined_call_operand.vmem [shape: f32[1,32], index: 4, kind: input, shape index: {}]
  %s5 = inlined_call_operand.vmem [shape: f32[32,6], index: 5, kind: input, shape index: {}]
  %s6 = inlined_call_operand.vmem [shape: f32[1,6], index: 6, kind: input, shape index: {}]
  %s7 = inlined_call_operand.hbm [shape: f32[2,6], index: 7, kind: output, shape index: {}]
  %s8 = sld [smem:[#allocation0]]
  $region38: #{plasticity_injection_forward.1} parent=0
    _
  %s10 = ssub.s32 1, %s8
  %s11 = scalar_select 0, %s10, %s8
  $region1: #{plasticity_injection_forward.1} parent=0
    #allocation2 [shape = 'u8[1024]{0}', space=vmem, size = 0x400, scoped, tag = 'output window, operand 0, single buffered']
    #allocation3 [shape = 's32[1]{0}', space=sflag, size = 0x4, scoped, tag = 'scoped memory for plasticity_injection_forward.1']
    %12 = vsyncpa [#allocation3], 0
    // Predicated region
    $region2: #{plasticity_injection_forward.1} parent=1 // pred_check
      _
    $region3: #{plasticity_injection_forward.1} parent=1 // pred_check_branch
      %14 = sbr.rel (0) target = $region5
    $region4: #{plasticity_injection_forward.1} parent=1 // pred_region
      _
    $region5: #{plasticity_injection_forward.1} parent=1 // pred_fallthru
      _
    // Predicated region
    $region6: #{plasticity_injection_forward.1} parent=1 // pred_check
      _
    $region7: #{plasticity_injection_forward.1} parent=1 // pred_check_branch
      %16 = sbr.rel (0) target = $region9
    $region8: #{plasticity_injection_forward.1} parent=1 // pred_region
      _
    $region9: #{plasticity_injection_forward.1} parent=1 // pred_fallthru
      _
    // Predicated region
    $region10: #{plasticity_injection_forward.1} parent=1 // pred_check
      _
    $region11: #{plasticity_injection_forward.1} parent=1 // pred_check_branch
      %18 = sbr.rel (0) target = $region13
    $region12: #{plasticity_injection_forward.1} parent=1 // pred_region
      _
    $region13: #{plasticity_injection_forward.1} parent=1 // pred_fallthru
      _
    // Predicated region
    $region14: #{plasticity_injection_forward.1} parent=1 // pred_check
      _
    $region15: #{plasticity_injection_forward.1} parent=1 // pred_check_branch
      %20 = sbr.rel (0) target = $region17
    $region16: #{plasticity_injection_forward.1} parent=1 // pred_region
      _
    $region17: #{plasticity_injection_forward.1} parent=1 // pred_fallthru
      _
    // Predicated region
    $region18: #{plasticity_injection_forward.1} parent=1 // pred_check
      _
    $region19: #{plasticity_injection_forward.1} parent=1 // pred_check_branch
      %22 = sbr.rel (0) target = $region21
    $region20: #{plasticity_injection_forward.1} parent=1 // pred_region
      _
    $region21: #{plasticity_injection_forward.1} parent=1 // pred_fallthru
      _
    // Predicated region
    $region22: #{plasticity_injection_forward.1} parent=1 // pred_check
      _
    $region23: #{plasticity_injection_forward.1} parent=1 // pred_check_branch
      %24 = sbr.rel (0) target = $region25
    $region24: #{plasticity_injection_forward.1} parent=1 // pred_region
      _
    $region25: #{plasticity_injection_forward.1} parent=1 // pred_fallthru
      _
    // Predicated region
    $region26: #{plasticity_injection_forward.1} parent=1 // pred_check
      _
    $region27: #{plasticity_injection_forward.1} parent=1 // pred_check_branch
      %26 = sbr.rel (0) target = $region29
    $region28: #{plasticity_injection_forward.1} parent=1 // pred_region
      _
    $region29: #{plasticity_injection_forward.1} parent=1 // pred_fallthru
      _
    %v27 = vld [vmem:[%s1] sm:$0xff]
    %v28 = vld [vmem:[%s2] sm:$0xff]
    %v29 = vld [vmem:[%s0] sm:$0xff]
    %v30 = vld [vmem:[%s0 + $0x8] sm:$0xff]
    %v31 = vld [vmem:[%s0 + $0x10] sm:$0xff]
    %v32 = vld [vmem:[%s0 + $0x18] sm:$0xff]
    %v33 = vld [vmem:[%s0 + $0x20] sm:$0xf]
    %35 = vset.pattern.permute.xlu0 0
    %36 = vperm.xlu0 %35, %v28
    %v37 = vpop.permute.xlu0 %36
    %vm39 = vcmask 293888
    %v41 = vsel %vm39, %v27, 0
    %vm43 = vcmask 1043456
    %v45 = vsel %vm43, %v33, 0
    %47 = vmatprep.subr.mxu0 0.0
    %48 = vmatpush1.msra.mxu0 %v29
    %49 = vmatprep.subr.mxu0 0.0
    %50 = vmatpush1.msra.mxu0 %v30
    %51 = vmatprep.subr.mxu0 0.0
    %52 = vmatpush1.msra.mxu0 %v31
    %53 = vmatprep.subr.mxu0 0.0
    %54 = vmatpush1.msra.mxu0 %v32
    %55 = vmatprep.subr.mxu0 0.0
    %56 = vmatpush1.msra.mxu0 %v45
    %57 = vmatprep.subr.mxu0 0.0
    %58 = vmatpush1.msra.mxu0 0.0
    %59 = vmatprep.subr.mxu0 0.0
    %60 = vmatpush1.msra.mxu0 0.0
    %61 = vmatprep.subr.mxu0 0.0
    %62 = vmatpush1.msra.mxu0 0.0
    %63 = vmatprep.subr.mxu0 0.0
    %64 = vmatpush1.msra.mxu0 0.0
    %65 = vmatprep.subr.mxu0 0.0
    %66 = vmatpush1.msra.mxu0 0.0
    %67 = vmatprep.subr.mxu0 0.0
    %68 = vmatpush1.msra.mxu0 0.0
    %69 = vmatprep.subr.mxu0 0.0
    %70 = vmatpush1.msra.mxu0 0.0
    %71 = vmatprep.subr.mxu0 0.0
    %72 = vmatpush1.msra.mxu0 0.0
    %73 = vmatprep.subr.mxu0 0.0
    %74 = vmatpush1.msra.mxu0 0.0
    %75 = vmatprep.subr.mxu0 0.0
    %76 = vmatpush1.msra.mxu0 0.0
    %77 = vmatprep.subr.mxu0 0.0
    %78 = vmatpush1.msra.mxu0 0.0
    %79 = vmatprep.subr.mxu0 0.0
    %80 = vmatpush1.msra.mxu0 0.0
    %81 = vmatprep.subr.mxu0 0.0
    %82 = vmatpush1.msra.mxu0 0.0
    %83 = vmatprep.subr.mxu0 0.0
    %84 = vmatpush1.msra.mxu0 0.0
    %85 = vmatprep.subr.mxu0 0.0
    %86 = vmatpush1.msra.mxu0 0.0
    %87 = vmatprep.subr.mxu0 0.0
    %88 = vmatpush1.msra.mxu0 0.0
    %89 = vmatprep.subr.mxu0 0.0
    %90 = vmatpush1.msra.mxu0 0.0
    %91 = vmatprep.subr.mxu0 0.0
    %92 = vmatpush1.msra.mxu0 0.0
    %93 = vmatprep.subr.mxu0 0.0
    %94 = vmatpush1.msra.mxu0 0.0
    %95 = vmatprep.subr.mxu0 0.0
    %96 = vmatpush1.msra.mxu0 0.0
    %97 = vmatprep.subr.mxu0 0.0
    %98 = vmatpush1.msra.mxu0 0.0
    %99 = vmatprep.subr.mxu0 0.0
    %100 = vmatpush1.msra.mxu0 0.0
    %101 = vmatprep.subr.mxu0 0.0
    %102 = vmatpush1.msra.mxu0 0.0
    %103 = vmatprep.subr.mxu0 0.0
    %104 = vmatpush1.msra.mxu0 0.0
    %105 = vmatprep.subr.mxu0 0.0
    %106 = vmatpush1.msra.mxu0 0.0
    %107 = vmatprep.subr.mxu0 0.0
    %108 = vmatpush1.msra.mxu0 0.0
    %109 = vmatprep.subr.mxu0 0.0
    %110 = vmatpush1.msra.mxu0 0.0
    %111 = vmatprep.mubr.f32.mxu0 0.0
    %112 = vmatmul.mubr.f32.gmra.mrb[0].mxu0 %v41
    %v113 = vpop.f32.mrb[0].mxu0
    %v114 = vadd.f32 %v37, %v113
    %v115 = vpop.f32.mrb[0].mxu0
    %116 = vdwg.mxu0
    %v117 = vmax.f32 %v114, 0.0
    %v118 = vld [vmem:[%s3] sm:$0xff]
    %v119 = vld [vmem:[%s3 + $0x8] sm:$0xff]
    %v120 = vld [vmem:[%s3 + $0x10] sm:$0xff]
    %v121 = vld [vmem:[%s3 + $0x18] sm:$0xff]
    %v122 = vld [vmem:[%s3 + $0x20] sm:$0xff]
    %v123 = vld [vmem:[%s3 + $0x28] sm:$0xff]
    %v124 = vld [vmem:[%s3 + $0x30] sm:$0xff]
    %v125 = vld [vmem:[%s3 + $0x38] sm:$0xff]
    %s126 = scalar_lea.vmem %s3, 64
    %v127 = vld [vmem:[%s126] sm:$0xff]
    %v128 = vld [vmem:[%s126 + $0x8] sm:$0xff]
    %v129 = vld [vmem:[%s126 + $0x10] sm:$0xff]
    %v130 = vld [vmem:[%s126 + $0x18] sm:$0xff]
    %v131 = vld [vmem:[%s126 + $0x20] sm:$0xff]
    %v132 = vld [vmem:[%s126 + $0x28] sm:$0xff]
    %v133 = vld [vmem:[%s126 + $0x30] sm:$0xff]
    %v134 = vld [vmem:[%s126 + $0x38] sm:$0xff]
    %v136 = vrot.slane %v117, 1
    %vm137 = vcmask 523264
    %v138 = vsel %vm137, %v136, 0
    %140 = vmatprep.subr.mxu0 0.0
    %141 = vmatpush1.msra.mxu0 %v127
    %142 = vmatprep.subr.mxu0 0.0
    %143 = vmatpush1.msra.mxu0 %v128
    %144 = vmatprep.subr.mxu0 0.0
    %145 = vmatpush1.msra.mxu0 %v129
    %146 = vmatprep.subr.mxu0 0.0
    %147 = vmatpush1.msra.mxu0 %v130
    %148 = vmatprep.subr.mxu0 0.0
    %149 = vmatpush1.msra.mxu0 %v131
    %150 = vmatprep.subr.mxu0 0.0
    %151 = vmatpush1.msra.mxu0 %v132
    %152 = vmatprep.subr.mxu0 0.0
    %153 = vmatpush1.msra.mxu0 %v133
    %154 = vmatprep.subr.mxu0 0.0
    %155 = vmatpush1.msra.mxu0 %v134
    %156 = vmatprep.subr.mxu0 0.0
    %157 = vmatpush1.msra.mxu0 0.0
    %158 = vmatprep.subr.mxu0 0.0
    %159 = vmatpush1.msra.mxu0 0.0
    %160 = vmatprep.subr.mxu0 0.0
    %161 = vmatpush1.msra.mxu0 0.0
    %162 = vmatprep.subr.mxu0 0.0
    %163 = vmatpush1.msra.mxu0 0.0
    %164 = vmatprep.subr.mxu0 0.0
    %165 = vmatpush1.msra.mxu0 0.0
    %166 = vmatprep.subr.mxu0 0.0
    %167 = vmatpush1.msra.mxu0 0.0
    %168 = vmatprep.subr.mxu0 0.0
    %169 = vmatpush1.msra.mxu0 0.0
    %170 = vmatprep.subr.mxu0 0.0
    %171 = vmatpush1.msra.mxu0 0.0
    %172 = vmatprep.subr.mxu0 0.0
    %173 = vmatpush1.msra.mxu0 0.0
    %174 = vmatprep.subr.mxu0 0.0
    %175 = vmatpush1.msra.mxu0 0.0
    %176 = vmatprep.subr.mxu0 0.0
    %177 = vmatpush1.msra.mxu0 0.0
    %178 = vmatprep.subr.mxu0 0.0
    %179 = vmatpush1.msra.mxu0 0.0
    %180 = vmatprep.subr.mxu0 0.0
    %181 = vmatpush1.msra.mxu0 0.0
    %182 = vmatprep.subr.mxu0 0.0
    %183 = vmatpush1.msra.mxu0 0.0
    %184 = vmatprep.subr.mxu0 0.0
    %185 = vmatpush1.msra.mxu0 0.0
    %186 = vmatprep.subr.mxu0 0.0
    %187 = vmatpush1.msra.mxu0 0.0
    %188 = vmatprep.subr.mxu0 0.0
    %189 = vmatpush1.msra.mxu0 0.0
    %190 = vmatprep.subr.mxu0 0.0
    %191 = vmatpush1.msra.mxu0 0.0
    %192 = vmatprep.subr.mxu0 0.0
    %193 = vmatpush1.msra.mxu0 0.0
    %194 = vmatprep.subr.mxu0 0.0
    %195 = vmatpush1.msra.mxu0 0.0
    %196 = vmatprep.subr.mxu0 0.0
    %197 = vmatpush1.msra.mxu0 0.0
    %198 = vmatprep.subr.mxu0 0.0
    %199 = vmatpush1.msra.mxu0 0.0
    %200 = vmatprep.subr.mxu0 0.0
    %201 = vmatpush1.msra.mxu0 0.0
    %202 = vmatprep.subr.mxu0 0.0
    %203 = vmatpush1.msra.mxu0 0.0
    %204 = vmatprep.mubr.f32.mxu0 0.0
    %205 = vmatmul.mubr.f32.gmra.mrb[0].mxu0 %v138
    %v206 = vpop.f32.mrb[0].mxu0
    %v207 = vadd.f32 0.0, %v206
    %v208 = vpop.f32.mrb[0].mxu0
    %209 = vdwg.mxu0
    %v210 = vsel %vm137, %v117, 0
    %212 = vmatprep.subr.mxu0 0.0
    %213 = vmatpush1.msra.mxu0 %v118
    %214 = vmatprep.subr.mxu0 0.0
    %215 = vmatpush1.msra.mxu0 %v119
    %216 = vmatprep.subr.mxu0 0.0
    %217 = vmatpush1.msra.mxu0 %v120
    %218 = vmatprep.subr.mxu0 0.0
    %219 = vmatpush1.msra.mxu0 %v121
    %220 = vmatprep.subr.mxu0 0.0
    %221 = vmatpush1.msra.mxu0 %v122
    %222 = vmatprep.subr.mxu0 0.0
    %223 = vmatpush1.msra.mxu0 %v123
    %224 = vmatprep.subr.mxu0 0.0
    %225 = vmatpush1.msra.mxu0 %v124
    %226 = vmatprep.subr.mxu0 0.0
    %227 = vmatpush1.msra.mxu0 %v125
    %228 = vmatprep.subr.mxu0 0.0
    %229 = vmatpush1.msra.mxu0 0.0
    %230 = vmatprep.subr.mxu0 0.0
    %231 = vmatpush1.msra.mxu0 0.0
    %232 = vmatprep.subr.mxu0 0.0
    %233 = vmatpush1.msra.mxu0 0.0
    %234 = vmatprep.subr.mxu0 0.0
    %235 = vmatpush1.msra.mxu0 0.0
    %236 = vmatprep.subr.mxu0 0.0
    %237 = vmatpush1.msra.mxu0 0.0
    %238 = vmatprep.subr.mxu0 0.0
    %239 = vmatpush1.msra.mxu0 0.0
    %240 = vmatprep.subr.mxu0 0.0
    %241 = vmatpush1.msra.mxu0 0.0
    %242 = vmatprep.subr.mxu0 0.0
    %243 = vmatpush1.msra.mxu0 0.0
    %244 = vmatprep.subr.mxu0 0.0
    %245 = vmatpush1.msra.mxu0 0.0
    %246 = vmatprep.subr.mxu0 0.0
    %247 = vmatpush1.msra.mxu0 0.0
    %248 = vmatprep.subr.mxu0 0.0
    %249 = vmatpush1.msra.mxu0 0.0
    %250 = vmatprep.subr.mxu0 0.0
    %251 = vmatpush1.msra.mxu0 0.0
    %252 = vmatprep.subr.mxu0 0.0
    %253 = vmatpush1.msra.mxu0 0.0
    %254 = vmatprep.subr.mxu0 0.0
    %255 = vmatpush1.msra.mxu0 0.0
    %256 = vmatprep.subr.mxu0 0.0
    %257 = vmatpush1.msra.mxu0 0.0
    %258 = vmatprep.subr.mxu0 0.0
    %259 = vmatpush1.msra.mxu0 0.0
    %260 = vmatprep.subr.mxu0 0.0
    %261 = vmatpush1.msra.mxu0 0.0
    %262 = vmatprep.subr.mxu0 0.0
    %263 = vmatpush1.msra.mxu0 0.0
    %264 = vmatprep.subr.mxu0 0.0
    %265 = vmatpush1.msra.mxu0 0.0
    %266 = vmatprep.subr.mxu0 0.0
    %267 = vmatpush1.msra.mxu0 0.0
    %268 = vmatprep.subr.mxu0 0.0
    %269 = vmatpush1.msra.mxu0 0.0
    %270 = vmatprep.subr.mxu0 0.0
    %271 = vmatpush1.msra.mxu0 0.0
    %272 = vmatprep.subr.mxu0 0.0
    %273 = vmatpush1.msra.mxu0 0.0
    %274 = vmatprep.subr.mxu0 0.0
    %275 = vmatpush1.msra.mxu0 0.0
    %276 = vmatprep.mubr.f32.mxu0 0.0
    %277 = vmatmul.mubr.f32.gmra.mrb[0].mxu0 %v210
    %v278 = vpop.f32.mrb[0].mxu0
    %v279 = vadd.f32 %v207, %v278
    %v280 = vpop.f32.mrb[0].mxu0
    %281 = vdwg.mxu0
    %s282 = scalar_lea.vmem %s3, 128
    %v283 = vld [vmem:[%s282] sm:$0xff]
    %v284 = vld [vmem:[%s282 + $0x8] sm:$0xff]
    %v285 = vld [vmem:[%s282 + $0x10] sm:$0xff]
    %v286 = vld [vmem:[%s282 + $0x18] sm:$0xff]
    %v287 = vld [vmem:[%s282 + $0x20] sm:$0xff]
    %v288 = vld [vmem:[%s282 + $0x28] sm:$0xff]
    %v289 = vld [vmem:[%s282 + $0x30] sm:$0xff]
    %v290 = vld [vmem:[%s282 + $0x38] sm:$0xff]
    %v291 = vrot.slane %v117, 2
    %v292 = vsel %vm137, %v291, 0
    %294 = vmatprep.subr.mxu0 0.0
    %295 = vmatpush1.msra.mxu0 %v283
    %296 = vmatprep.subr.mxu0 0.0
    %297 = vmatpush1.msra.mxu0 %v284
    %298 = vmatprep.subr.mxu0 0.0
    %299 = vmatpush1.msra.mxu0 %v285
    %300 = vmatprep.subr.mxu0 0.0
    %301 = vmatpush1.msra.mxu0 %v286
    %302 = vmatprep.subr.mxu0 0.0
    %303 = vmatpush1.msra.mxu0 %v287
    %304 = vmatprep.subr.mxu0 0.0
    %305 = vmatpush1.msra.mxu0 %v288
    %306 = vmatprep.subr.mxu0 0.0
    %307 = vmatpush1.msra.mxu0 %v289
    %308 = vmatprep.subr.mxu0 0.0
    %309 = vmatpush1.msra.mxu0 %v290
    %310 = vmatprep.subr.mxu0 0.0
    %311 = vmatpush1.msra.mxu0 0.0
    %312 = vmatprep.subr.mxu0 0.0
    %313 = vmatpush1.msra.mxu0 0.0
    %314 = vmatprep.subr.mxu0 0.0
    %315 = vmatpush1.msra.mxu0 0.0
    %316 = vmatprep.subr.mxu0 0.0
    %317 = vmatpush1.msra.mxu0 0.0
    %318 = vmatprep.subr.mxu0 0.0
    %319 = vmatpush1.msra.mxu0 0.0
    %320 = vmatprep.subr.mxu0 0.0
    %321 = vmatpush1.msra.mxu0 0.0
    %322 = vmatprep.subr.mxu0 0.0
    %323 = vmatpush1.msra.mxu0 0.0
    %324 = vmatprep.subr.mxu0 0.0
    %325 = vmatpush1.msra.mxu0 0.0
    %326 = vmatprep.subr.mxu0 0.0
    %327 = vmatpush1.msra.mxu0 0.0
    %328 = vmatprep.subr.mxu0 0.0
    %329 = vmatpush1.msra.mxu0 0.0
    %330 = vmatprep.subr.mxu0 0.0
    %331 = vmatpush1.msra.mxu0 0.0
    %332 = vmatprep.subr.mxu0 0.0
    %333 = vmatpush1.msra.mxu0 0.0
    %334 = vmatprep.subr.mxu0 0.0
    %335 = vmatpush1.msra.mxu0 0.0
    %336 = vmatprep.subr.mxu0 0.0
    %337 = vmatpush1.msra.mxu0 0.0
    %338 = vmatprep.subr.mxu0 0.0
    %339 = vmatpush1.msra.mxu0 0.0
    %340 = vmatprep.subr.mxu0 0.0
    %341 = vmatpush1.msra.mxu0 0.0
    %342 = vmatprep.subr.mxu0 0.0
    %343 = vmatpush1.msra.mxu0 0.0
    %344 = vmatprep.subr.mxu0 0.0
    %345 = vmatpush1.msra.mxu0 0.0
    %346 = vmatprep.subr.mxu0 0.0
    %347 = vmatpush1.msra.mxu0 0.0
    %348 = vmatprep.subr.mxu0 0.0
    %349 = vmatpush1.msra.mxu0 0.0
    %350 = vmatprep.subr.mxu0 0.0
    %351 = vmatpush1.msra.mxu0 0.0
    %352 = vmatprep.subr.mxu0 0.0
    %353 = vmatpush1.msra.mxu0 0.0
    %354 = vmatprep.subr.mxu0 0.0
    %355 = vmatpush1.msra.mxu0 0.0
    %356 = vmatprep.subr.mxu0 0.0
    %357 = vmatpush1.msra.mxu0 0.0
    %358 = vmatprep.mubr.f32.mxu0 0.0
    %359 = vmatmul.mubr.f32.gmra.mrb[0].mxu0 %v292
    %v360 = vpop.f32.mrb[0].mxu0
    %v361 = vadd.f32 0.0, %v360
    %v362 = vpop.f32.mrb[0].mxu0
    %363 = vdwg.mxu0
    %v364 = vadd.f32 %v279, %v361
    %s365 = scalar_lea.vmem %s3, 192
    %v366 = vld [vmem:[%s365] sm:$0xff]
    %v367 = vld [vmem:[%s365 + $0x8] sm:$0xff]
    %v368 = vld [vmem:[%s365 + $0x10] sm:$0xff]
    %v369 = vld [vmem:[%s365 + $0x18] sm:$0xff]
    %v370 = vld [vmem:[%s365 + $0x20] sm:$0xff]
    %v371 = vld [vmem:[%s365 + $0x28] sm:$0xff]
    %v372 = vld [vmem:[%s365 + $0x30] sm:$0xff]
    %v373 = vld [vmem:[%s365 + $0x38] sm:$0xff]
    %v374 = vrot.slane %v117, 3
    %v375 = vsel %vm137, %v374, 0
    %377 = vmatprep.subr.mxu0 0.0
    %378 = vmatpush1.msra.mxu0 %v366
    %379 = vmatprep.subr.mxu0 0.0
    %380 = vmatpush1.msra.mxu0 %v367
    %381 = vmatprep.subr.mxu0 0.0
    %382 = vmatpush1.msra.mxu0 %v368
    %383 = vmatprep.subr.mxu0 0.0
    %384 = vmatpush1.msra.mxu0 %v369
    %385 = vmatprep.subr.mxu0 0.0
    %386 = vmatpush1.msra.mxu0 %v370
    %387 = vmatprep.subr.mxu0 0.0
    %388 = vmatpush1.msra.mxu0 %v371
    %389 = vmatprep.subr.mxu0 0.0
    %390 = vmatpush1.msra.mxu0 %v372
    %391 = vmatprep.subr.mxu0 0.0
    %392 = vmatpush1.msra.mxu0 %v373
    %393 = vmatprep.subr.mxu0 0.0
    %394 = vmatpush1.msra.mxu0 0.0
    %395 = vmatprep.subr.mxu0 0.0
    %396 = vmatpush1.msra.mxu0 0.0
    %397 = vmatprep.subr.mxu0 0.0
    %398 = vmatpush1.msra.mxu0 0.0
    %399 = vmatprep.subr.mxu0 0.0
    %400 = vmatpush1.msra.mxu0 0.0
    %401 = vmatprep.subr.mxu0 0.0
    %402 = vmatpush1.msra.mxu0 0.0
    %403 = vmatprep.subr.mxu0 0.0
    %404 = vmatpush1.msra.mxu0 0.0
    %405 = vmatprep.subr.mxu0 0.0
    %406 = vmatpush1.msra.mxu0 0.0
    %407 = vmatprep.subr.mxu0 0.0
    %408 = vmatpush1.msra.mxu0 0.0
    %409 = vmatprep.subr.mxu0 0.0
    %410 = vmatpush1.msra.mxu0 0.0
    %411 = vmatprep.subr.mxu0 0.0
    %412 = vmatpush1.msra.mxu0 0.0
    %413 = vmatprep.subr.mxu0 0.0
    %414 = vmatpush1.msra.mxu0 0.0
    %415 = vmatprep.subr.mxu0 0.0
    %416 = vmatpush1.msra.mxu0 0.0
    %417 = vmatprep.subr.mxu0 0.0
    %418 = vmatpush1.msra.mxu0 0.0
    %419 = vmatprep.subr.mxu0 0.0
    %420 = vmatpush1.msra.mxu0 0.0
    %421 = vmatprep.subr.mxu0 0.0
    %422 = vmatpush1.msra.mxu0 0.0
    %423 = vmatprep.subr.mxu0 0.0
    %424 = vmatpush1.msra.mxu0 0.0
    %425 = vmatprep.subr.mxu0 0.0
    %426 = vmatpush1.msra.mxu0 0.0
    %427 = vmatprep.subr.mxu0 0.0
    %428 = vmatpush1.msra.mxu0 0.0
    %429 = vmatprep.subr.mxu0 0.0
    %430 = vmatpush1.msra.mxu0 0.0
    %431 = vmatprep.subr.mxu0 0.0
    %432 = vmatpush1.msra.mxu0 0.0
    %433 = vmatprep.subr.mxu0 0.0
    %434 = vmatpush1.msra.mxu0 0.0
    %435 = vmatprep.subr.mxu0 0.0
    %436 = vmatpush1.msra.mxu0 0.0
    %437 = vmatprep.subr.mxu0 0.0
    %438 = vmatpush1.msra.mxu0 0.0
    %439 = vmatprep.subr.mxu0 0.0
    %440 = vmatpush1.msra.mxu0 0.0
    %441 = vmatprep.mubr.f32.mxu0 0.0
    %442 = vmatmul.mubr.f32.gmra.mrb[0].mxu0 %v375
    %v443 = vpop.f32.mrb[0].mxu0
    %v444 = vadd.f32 0.0, %v443
    %v445 = vpop.f32.mrb[0].mxu0
    %446 = vdwg.mxu0
    %v447 = vadd.f32 %v364, %v444
    %s448 = scalar_lea.vmem %s3, 256
    %v449 = vld [vmem:[%s448] sm:$0xff]
    %v450 = vld [vmem:[%s448 + $0x8] sm:$0xff]
    %v451 = vld [vmem:[%s448 + $0x10] sm:$0xff]
    %v452 = vld [vmem:[%s448 + $0x18] sm:$0xff]
    %v453 = vld [vmem:[%s448 + $0x20] sm:$0xff]
    %v454 = vld [vmem:[%s448 + $0x28] sm:$0xff]
    %v455 = vld [vmem:[%s448 + $0x30] sm:$0xff]
    %v456 = vld [vmem:[%s448 + $0x38] sm:$0xff]
    %v457 = vrot.slane %v117, 4
    %v458 = vsel %vm137, %v457, 0
    %460 = vmatprep.subr.mxu0 0.0
    %461 = vmatpush1.msra.mxu0 %v449
    %462 = vmatprep.subr.mxu0 0.0
    %463 = vmatpush1.msra.mxu0 %v450
    %464 = vmatprep.subr.mxu0 0.0
    %465 = vmatpush1.msra.mxu0 %v451
    %466 = vmatprep.subr.mxu0 0.0
    %467 = vmatpush1.msra.mxu0 %v452
    %468 = vmatprep.subr.mxu0 0.0
    %469 = vmatpush1.msra.mxu0 %v453
    %470 = vmatprep.subr.mxu0 0.0
    %471 = vmatpush1.msra.mxu0 %v454
    %472 = vmatprep.subr.mxu0 0.0
    %473 = vmatpush1.msra.mxu0 %v455
    %474 = vmatprep.subr.mxu0 0.0
    %475 = vmatpush1.msra.mxu0 %v456
    %476 = vmatprep.subr.mxu0 0.0
    %477 = vmatpush1.msra.mxu0 0.0
    %478 = vmatprep.subr.mxu0 0.0
    %479 = vmatpush1.msra.mxu0 0.0
    %480 = vmatprep.subr.mxu0 0.0
    %481 = vmatpush1.msra.mxu0 0.0
    %482 = vmatprep.subr.mxu0 0.0
    %483 = vmatpush1.msra.mxu0 0.0
    %484 = vmatprep.subr.mxu0 0.0
    %485 = vmatpush1.msra.mxu0 0.0
    %486 = vmatprep.subr.mxu0 0.0
    %487 = vmatpush1.msra.mxu0 0.0
    %488 = vmatprep.subr.mxu0 0.0
    %489 = vmatpush1.msra.mxu0 0.0
    %490 = vmatprep.subr.mxu0 0.0
    %491 = vmatpush1.msra.mxu0 0.0
    %492 = vmatprep.subr.mxu0 0.0
    %493 = vmatpush1.msra.mxu0 0.0
    %494 = vmatprep.subr.mxu0 0.0
    %495 = vmatpush1.msra.mxu0 0.0
    %496 = vmatprep.subr.mxu0 0.0
    %497 = vmatpush1.msra.mxu0 0.0
    %498 = vmatprep.subr.mxu0 0.0
    %499 = vmatpush1.msra.mxu0 0.0
    %500 = vmatprep.subr.mxu0 0.0
    %501 = vmatpush1.msra.mxu0 0.0
    %502 = vmatprep.subr.mxu0 0.0
    %503 = vmatpush1.msra.mxu0 0.0
    %504 = vmatprep.subr.mxu0 0.0
    %505 = vmatpush1.msra.mxu0 0.0
    %506 = vmatprep.subr.mxu0 0.0
    %507 = vmatpush1.msra.mxu0 0.0
    %508 = vmatprep.subr.mxu0 0.0
    %509 = vmatpush1.msra.mxu0 0.0
    %510 = vmatprep.subr.mxu0 0.0
    %511 = vmatpush1.msra.mxu0 0.0
    %512 = vmatprep.subr.mxu0 0.0
    %513 = vmatpush1.msra.mxu0 0.0
    %514 = vmatprep.subr.mxu0 0.0
    %515 = vmatpush1.msra.mxu0 0.0
    %516 = vmatprep.subr.mxu0 0.0
    %517 = vmatpush1.msra.mxu0 0.0
    %518 = vmatprep.subr.mxu0 0.0
    %519 = vmatpush1.msra.mxu0 0.0
    %520 = vmatprep.subr.mxu0 0.0
    %521 = vmatpush1.msra.mxu0 0.0
    %522 = vmatprep.subr.mxu0 0.0
    %523 = vmatpush1.msra.mxu0 0.0
    %524 = vmatprep.mubr.f32.mxu0 0.0
    %525 = vmatmul.mubr.f32.gmra.mrb[0].mxu0 %v458
    %v526 = vpop.f32.mrb[0].mxu0
    %v527 = vadd.f32 0.0, %v526
    %v528 = vpop.f32.mrb[0].mxu0
    %529 = vdwg.mxu0
    %v530 = vadd.f32 %v447, %v527
    %s531 = scalar_lea.vmem %s3, 320
    %v532 = vld [vmem:[%s531] sm:$0xff]
    %v533 = vld [vmem:[%s531 + $0x8] sm:$0xff]
    %v534 = vld [vmem:[%s531 + $0x10] sm:$0xff]
    %v535 = vld [vmem:[%s531 + $0x18] sm:$0xff]
    %v536 = vld [vmem:[%s531 + $0x20] sm:$0xff]
    %v537 = vld [vmem:[%s531 + $0x28] sm:$0xff]
    %v538 = vld [vmem:[%s531 + $0x30] sm:$0xff]
    %v539 = vld [vmem:[%s531 + $0x38] sm:$0xff]
    %v540 = vrot.slane %v117, 5
    %v541 = vsel %vm137, %v540, 0
    %543 = vmatprep.subr.mxu0 0.0
    %544 = vmatpush1.msra.mxu0 %v532
    %545 = vmatprep.subr.mxu0 0.0
    %546 = vmatpush1.msra.mxu0 %v533
    %547 = vmatprep.subr.mxu0 0.0
    %548 = vmatpush1.msra.mxu0 %v534
    %549 = vmatprep.subr.mxu0 0.0
    %550 = vmatpush1.msra.mxu0 %v535
    %551 = vmatprep.subr.mxu0 0.0
    %552 = vmatpush1.msra.mxu0 %v536
    %553 = vmatprep.subr.mxu0 0.0
    %554 = vmatpush1.msra.mxu0 %v537
    %555 = vmatprep.subr.mxu0 0.0
    %556 = vmatpush1.msra.mxu0 %v538
    %557 = vmatprep.subr.mxu0 0.0
    %558 = vmatpush1.msra.mxu0 %v539
    %559 = vmatprep.subr.mxu0 0.0
    %560 = vmatpush1.msra.mxu0 0.0
    %561 = vmatprep.subr.mxu0 0.0
    %562 = vmatpush1.msra.mxu0 0.0
    %563 = vmatprep.subr.mxu0 0.0
    %564 = vmatpush1.msra.mxu0 0.0
    %565 = vmatprep.subr.mxu0 0.0
    %566 = vmatpush1.msra.mxu0 0.0
    %567 = vmatprep.subr.mxu0 0.0
    %568 = vmatpush1.msra.mxu0 0.0
    %569 = vmatprep.subr.mxu0 0.0
    %570 = vmatpush1.msra.mxu0 0.0
    %571 = vmatprep.subr.mxu0 0.0
    %572 = vmatpush1.msra.mxu0 0.0
    %573 = vmatprep.subr.mxu0 0.0
    %574 = vmatpush1.msra.mxu0 0.0
    %575 = vmatprep.subr.mxu0 0.0
    %576 = vmatpush1.msra.mxu0 0.0
    %577 = vmatprep.subr.mxu0 0.0
    %578 = vmatpush1.msra.mxu0 0.0
    %579 = vmatprep.subr.mxu0 0.0
    %580 = vmatpush1.msra.mxu0 0.0
    %581 = vmatprep.subr.mxu0 0.0
    %582 = vmatpush1.msra.mxu0 0.0
    %583 = vmatprep.subr.mxu0 0.0
    %584 = vmatpush1.msra.mxu0 0.0
    %585 = vmatprep.subr.mxu0 0.0
    %586 = vmatpush1.msra.mxu0 0.0
    %587 = vmatprep.subr.mxu0 0.0
    %588 = vmatpush1.msra.mxu0 0.0
    %589 = vmatprep.subr.mxu0 0.0
    %590 = vmatpush1.msra.mxu0 0.0
    %591 = vmatprep.subr.mxu0 0.0
    %592 = vmatpush1.msra.mxu0 0.0
    %593 = vmatprep.subr.mxu0 0.0
    %594 = vmatpush1.msra.mxu0 0.0
    %595 = vmatprep.subr.mxu0 0.0
    %596 = vmatpush1.msra.mxu0 0.0
    %597 = vmatprep.subr.mxu0 0.0
    %598 = vmatpush1.msra.mxu0 0.0
    %599 = vmatprep.subr.mxu0 0.0
    %600 = vmatpush1.msra.mxu0 0.0
    %601 = vmatprep.subr.mxu0 0.0
    %602 = vmatpush1.msra.mxu0 0.0
    %603 = vmatprep.subr.mxu0 0.0
    %604 = vmatpush1.msra.mxu0 0.0
    %605 = vmatprep.subr.mxu0 0.0
    %606 = vmatpush1.msra.mxu0 0.0
    %607 = vmatprep.mubr.f32.mxu0 0.0
    %608 = vmatmul.mubr.f32.gmra.mrb[0].mxu0 %v541
    %v609 = vpop.f32.mrb[0].mxu0
    %v610 = vadd.f32 0.0, %v609
    %v611 = vpop.f32.mrb[0].mxu0
    %612 = vdwg.mxu0
    %v613 = vadd.f32 %v530, %v610
    %s614 = scalar_lea.vmem %s3, 384
    %v615 = vld [vmem:[%s614] sm:$0xff]
    %v616 = vld [vmem:[%s614 + $0x8] sm:$0xff]
    %v617 = vld [vmem:[%s614 + $0x10] sm:$0xff]
    %v618 = vld [vmem:[%s614 + $0x18] sm:$0xff]
    %v619 = vld [vmem:[%s614 + $0x20] sm:$0xff]
    %v620 = vld [vmem:[%s614 + $0x28] sm:$0xff]
    %v621 = vld [vmem:[%s614 + $0x30] sm:$0xff]
    %v622 = vld [vmem:[%s614 + $0x38] sm:$0xff]
    %v623 = vrot.slane %v117, 6
    %v624 = vsel %vm137, %v623, 0
    %626 = vmatprep.subr.mxu0 0.0
    %627 = vmatpush1.msra.mxu0 %v615
    %628 = vmatprep.subr.mxu0 0.0
    %629 = vmatpush1.msra.mxu0 %v616
    %630 = vmatprep.subr.mxu0 0.0
    %631 = vmatpush1.msra.mxu0 %v617
    %632 = vmatprep.subr.mxu0 0.0
    %633 = vmatpush1.msra.mxu0 %v618
    %634 = vmatprep.subr.mxu0 0.0
    %635 = vmatpush1.msra.mxu0 %v619
    %636 = vmatprep.subr.mxu0 0.0
    %637 = vmatpush1.msra.mxu0 %v620
    %638 = vmatprep.subr.mxu0 0.0
    %639 = vmatpush1.msra.mxu0 %v621
    %640 = vmatprep.subr.mxu0 0.0
    %641 = vmatpush1.msra.mxu0 %v622
    %642 = vmatprep.subr.mxu0 0.0
    %643 = vmatpush1.msra.mxu0 0.0
    %644 = vmatprep.subr.mxu0 0.0
    %645 = vmatpush1.msra.mxu0 0.0
    %646 = vmatprep.subr.mxu0 0.0
    %647 = vmatpush1.msra.mxu0 0.0
    %648 = vmatprep.subr.mxu0 0.0
    %649 = vmatpush1.msra.mxu0 0.0
    %650 = vmatprep.subr.mxu0 0.0
    %651 = vmatpush1.msra.mxu0 0.0
    %652 = vmatprep.subr.mxu0 0.0
    %653 = vmatpush1.msra.mxu0 0.0
    %654 = vmatprep.subr.mxu0 0.0
    %655 = vmatpush1.msra.mxu0 0.0
    %656 = vmatprep.subr.mxu0 0.0
    %657 = vmatpush1.msra.mxu0 0.0
    %658 = vmatprep.subr.mxu0 0.0
    %659 = vmatpush1.msra.mxu0 0.0
    %660 = vmatprep.subr.mxu0 0.0
    %661 = vmatpush1.msra.mxu0 0.0
    %662 = vmatprep.subr.mxu0 0.0
    %663 = vmatpush1.msra.mxu0 0.0
    %664 = vmatprep.subr.mxu0 0.0
    %665 = vmatpush1.msra.mxu0 0.0
    %666 = vmatprep.subr.mxu0 0.0
    %667 = vmatpush1.msra.mxu0 0.0
    %668 = vmatprep.subr.mxu0 0.0
    %669 = vmatpush1.msra.mxu0 0.0
    %670 = vmatprep.subr.mxu0 0.0
    %671 = vmatpush1.msra.mxu0 0.0
    %672 = vmatprep.subr.mxu0 0.0
    %673 = vmatpush1.msra.mxu0 0.0
    %674 = vmatprep.subr.mxu0 0.0
    %675 = vmatpush1.msra.mxu0 0.0
    %676 = vmatprep.subr.mxu0 0.0
    %677 = vmatpush1.msra.mxu0 0.0
    %678 = vmatprep.subr.mxu0 0.0
    %679 = vmatpush1.msra.mxu0 0.0
    %680 = vmatprep.subr.mxu0 0.0
    %681 = vmatpush1.msra.mxu0 0.0
    %682 = vmatprep.subr.mxu0 0.0
    %683 = vmatpush1.msra.mxu0 0.0
    %684 = vmatprep.subr.mxu0 0.0
    %685 = vmatpush1.msra.mxu0 0.0
    %686 = vmatprep.subr.mxu0 0.0
    %687 = vmatpush1.msra.mxu0 0.0
    %688 = vmatprep.subr.mxu0 0.0
    %689 = vmatpush1.msra.mxu0 0.0
    %690 = vmatprep.mubr.f32.mxu0 0.0
    %691 = vmatmul.mubr.f32.gmra.mrb[0].mxu0 %v624
    %v692 = vpop.f32.mrb[0].mxu0
    %v693 = vadd.f32 0.0, %v692
    %v694 = vpop.f32.mrb[0].mxu0
    %695 = vdwg.mxu0
    %v696 = vadd.f32 %v613, %v693
    %s697 = scalar_lea.vmem %s3, 448
    %v698 = vld [vmem:[%s697] sm:$0xff]
    %v699 = vld [vmem:[%s697 + $0x8] sm:$0xff]
    %v700 = vld [vmem:[%s697 + $0x10] sm:$0xff]
    %v701 = vld [vmem:[%s697 + $0x18] sm:$0xff]
    %v702 = vld [vmem:[%s697 + $0x20] sm:$0xff]
    %v703 = vld [vmem:[%s697 + $0x28] sm:$0xff]
    %v704 = vld [vmem:[%s697 + $0x30] sm:$0xff]
    %v705 = vld [vmem:[%s697 + $0x38] sm:$0xff]
    %v706 = vrot.slane %v117, 7
    %v707 = vsel %vm137, %v706, 0
    %709 = vmatprep.subr.mxu0 0.0
    %710 = vmatpush1.msra.mxu0 %v698
    %711 = vmatprep.subr.mxu0 0.0
    %712 = vmatpush1.msra.mxu0 %v699
    %713 = vmatprep.subr.mxu0 0.0
    %714 = vmatpush1.msra.mxu0 %v700
    %715 = vmatprep.subr.mxu0 0.0
    %716 = vmatpush1.msra.mxu0 %v701
    %717 = vmatprep.subr.mxu0 0.0
    %718 = vmatpush1.msra.mxu0 %v702
    %719 = vmatprep.subr.mxu0 0.0
    %720 = vmatpush1.msra.mxu0 %v703
    %721 = vmatprep.subr.mxu0 0.0
    %722 = vmatpush1.msra.mxu0 %v704
    %723 = vmatprep.subr.mxu0 0.0
    %724 = vmatpush1.msra.mxu0 %v705
    %725 = vmatprep.subr.mxu0 0.0
    %726 = vmatpush1.msra.mxu0 0.0
    %727 = vmatprep.subr.mxu0 0.0
    %728 = vmatpush1.msra.mxu0 0.0
    %729 = vmatprep.subr.mxu0 0.0
    %730 = vmatpush1.msra.mxu0 0.0
    %731 = vmatprep.subr.mxu0 0.0
    %732 = vmatpush1.msra.mxu0 0.0
    %733 = vmatprep.subr.mxu0 0.0
    %734 = vmatpush1.msra.mxu0 0.0
    %735 = vmatprep.subr.mxu0 0.0
    %736 = vmatpush1.msra.mxu0 0.0
    %737 = vmatprep.subr.mxu0 0.0
    %738 = vmatpush1.msra.mxu0 0.0
    %739 = vmatprep.subr.mxu0 0.0
    %740 = vmatpush1.msra.mxu0 0.0
    %741 = vmatprep.subr.mxu0 0.0
    %742 = vmatpush1.msra.mxu0 0.0
    %743 = vmatprep.subr.mxu0 0.0
    %744 = vmatpush1.msra.mxu0 0.0
    %745 = vmatprep.subr.mxu0 0.0
    %746 = vmatpush1.msra.mxu0 0.0
    %747 = vmatprep.subr.mxu0 0.0
    %748 = vmatpush1.msra.mxu0 0.0
    %749 = vmatprep.subr.mxu0 0.0
    %750 = vmatpush1.msra.mxu0 0.0
    %751 = vmatprep.subr.mxu0 0.0
    %752 = vmatpush1.msra.mxu0 0.0
    %753 = vmatprep.subr.mxu0 0.0
    %754 = vmatpush1.msra.mxu0 0.0
    %755 = vmatprep.subr.mxu0 0.0
    %756 = vmatpush1.msra.mxu0 0.0
    %757 = vmatprep.subr.mxu0 0.0
    %758 = vmatpush1.msra.mxu0 0.0
    %759 = vmatprep.subr.mxu0 0.0
    %760 = vmatpush1.msra.mxu0 0.0
    %761 = vmatprep.subr.mxu0 0.0
    %762 = vmatpush1.msra.mxu0 0.0
    %763 = vmatprep.subr.mxu0 0.0
    %764 = vmatpush1.msra.mxu0 0.0
    %765 = vmatprep.subr.mxu0 0.0
    %766 = vmatpush1.msra.mxu0 0.0
    %767 = vmatprep.subr.mxu0 0.0
    %768 = vmatpush1.msra.mxu0 0.0
    %769 = vmatprep.subr.mxu0 0.0
    %770 = vmatpush1.msra.mxu0 0.0
    %771 = vmatprep.subr.mxu0 0.0
    %772 = vmatpush1.msra.mxu0 0.0
    %773 = vmatprep.mubr.f32.mxu0 0.0
    %774 = vmatmul.mubr.f32.gmra.mrb[0].mxu0 %v707
    %v775 = vpop.f32.mrb[0].mxu0
    %v776 = vadd.f32 0.0, %v775
    %v777 = vpop.f32.mrb[0].mxu0
    %778 = vdwg.mxu0
    %v779 = vadd.f32 %v696, %v776
    %s780 = scalar_lea.vmem %s0, 40
    %v781 = vld [vmem:[%s780] sm:$0xff]
    %v782 = vld [vmem:[%s780 + $0x8] sm:$0xff]
    %v783 = vld [vmem:[%s780 + $0x10] sm:$0xff]
    %v784 = vld [vmem:[%s780 + $0x18] sm:$0xff]
    %v785 = vld [vmem:[%s780 + $0x20] sm:$0xf]
    %v787 = vsel %vm43, %v785, 0
    %789 = vmatprep.subr.mxu0 0.0
    %790 = vmatpush1.msra.mxu0 %v781
    %791 = vmatprep.subr.mxu0 0.0
    %792 = vmatpush1.msra.mxu0 %v782
    %793 = vmatprep.subr.mxu0 0.0
    %794 = vmatpush1.msra.mxu0 %v783
    %795 = vmatprep.subr.mxu0 0.0
    %796 = vmatpush1.msra.mxu0 %v784
    %797 = vmatprep.subr.mxu0 0.0
    %798 = vmatpush1.msra.mxu0 %v787
    %799 = vmatprep.subr.mxu0 0.0
    %800 = vmatpush1.msra.mxu0 0.0
    %801 = vmatprep.subr.mxu0 0.0
    %802 = vmatpush1.msra.mxu0 0.0
    %803 = vmatprep.subr.mxu0 0.0
    %804 = vmatpush1.msra.mxu0 0.0
    %805 = vmatprep.subr.mxu0 0.0
    %806 = vmatpush1.msra.mxu0 0.0
    %807 = vmatprep.subr.mxu0 0.0
    %808 = vmatpush1.msra.mxu0 0.0
    %809 = vmatprep.subr.mxu0 0.0
    %810 = vmatpush1.msra.mxu0 0.0
    %811 = vmatprep.subr.mxu0 0.0
    %812 = vmatpush1.msra.mxu0 0.0
    %813 = vmatprep.subr.mxu0 0.0
    %814 = vmatpush1.msra.mxu0 0.0
    %815 = vmatprep.subr.mxu0 0.0
    %816 = vmatpush1.msra.mxu0 0.0
    %817 = vmatprep.subr.mxu0 0.0
    %818 = vmatpush1.msra.mxu0 0.0
    %819 = vmatprep.subr.mxu0 0.0
    %820 = vmatpush1.msra.mxu0 0.0
    %821 = vmatprep.subr.mxu0 0.0
    %822 = vmatpush1.msra.mxu0 0.0
    %823 = vmatprep.subr.mxu0 0.0
    %824 = vmatpush1.msra.mxu0 0.0
    %825 = vmatprep.subr.mxu0 0.0
    %826 = vmatpush1.msra.mxu0 0.0
    %827 = vmatprep.subr.mxu0 0.0
    %828 = vmatpush1.msra.mxu0 0.0
    %829 = vmatprep.subr.mxu0 0.0
    %830 = vmatpush1.msra.mxu0 0.0
    %831 = vmatprep.subr.mxu0 0.0
    %832 = vmatpush1.msra.mxu0 0.0
    %833 = vmatprep.subr.mxu0 0.0
    %834 = vmatpush1.msra.mxu0 0.0
    %835 = vmatprep.subr.mxu0 0.0
    %836 = vmatpush1.msra.mxu0 0.0
    %837 = vmatprep.subr.mxu0 0.0
    %838 = vmatpush1.msra.mxu0 0.0
    %839 = vmatprep.subr.mxu0 0.0
    %840 = vmatpush1.msra.mxu0 0.0
    %841 = vmatprep.subr.mxu0 0.0
    %842 = vmatpush1.msra.mxu0 0.0
    %843 = vmatprep.subr.mxu0 0.0
    %844 = vmatpush1.msra.mxu0 0.0
    %845 = vmatprep.subr.mxu0 0.0
    %846 = vmatpush1.msra.mxu0 0.0
    %847 = vmatprep.subr.mxu0 0.0
    %848 = vmatpush1.msra.mxu0 0.0
    %849 = vmatprep.subr.mxu0 0.0
    %850 = vmatpush1.msra.mxu0 0.0
    %851 = vmatprep.subr.mxu0 0.0
    %852 = vmatpush1.msra.mxu0 0.0
    %853 = vmatprep.mubr.f32.mxu0 0.0
    %854 = vmatmul.mubr.f32.gmra.mrb[0].mxu0 %v41
    %v855 = vpop.f32.mrb[0].mxu0
    %v856 = vadd.f32 %v37, %v855
    %v857 = vpop.f32.mrb[0].mxu0
    %858 = vdwg.mxu0
    %v859 = vmax.f32 %v856, 0.0
    %v861 = vrot.slane %v859, 1
    %v862 = vsel %vm137, %v861, 0
    %864 = vmatprep.subr.mxu0 0.0
    %865 = vmatpush1.msra.mxu0 %v127
    %866 = vmatprep.subr.mxu0 0.0
    %867 = vmatpush1.msra.mxu0 %v128
    %868 = vmatprep.subr.mxu0 0.0
    %869 = vmatpush1.msra.mxu0 %v129
    %870 = vmatprep.subr.mxu0 0.0
    %871 = vmatpush1.msra.mxu0 %v130
    %872 = vmatprep.subr.mxu0 0.0
    %873 = vmatpush1.msra.mxu0 %v131
    %874 = vmatprep.subr.mxu0 0.0
    %875 = vmatpush1.msra.mxu0 %v132
    %876 = vmatprep.subr.mxu0 0.0
    %877 = vmatpush1.msra.mxu0 %v133
    %878 = vmatprep.subr.mxu0 0.0
    %879 = vmatpush1.msra.mxu0 %v134
    %880 = vmatprep.subr.mxu0 0.0
    %881 = vmatpush1.msra.mxu0 0.0
    %882 = vmatprep.subr.mxu0 0.0
    %883 = vmatpush1.msra.mxu0 0.0
    %884 = vmatprep.subr.mxu0 0.0
    %885 = vmatpush1.msra.mxu0 0.0
    %886 = vmatprep.subr.mxu0 0.0
    %887 = vmatpush1.msra.mxu0 0.0
    %888 = vmatprep.subr.mxu0 0.0
    %889 = vmatpush1.msra.mxu0 0.0
    %890 = vmatprep.subr.mxu0 0.0
    %891 = vmatpush1.msra.mxu0 0.0
    %892 = vmatprep.subr.mxu0 0.0
    %893 = vmatpush1.msra.mxu0 0.0
    %894 = vmatprep.subr.mxu0 0.0
    %895 = vmatpush1.msra.mxu0 0.0
    %896 = vmatprep.subr.mxu0 0.0
    %897 = vmatpush1.msra.mxu0 0.0
    %898 = vmatprep.subr.mxu0 0.0
    %899 = vmatpush1.msra.mxu0 0.0
    %900 = vmatprep.subr.mxu0 0.0
    %901 = vmatpush1.msra.mxu0 0.0
    %902 = vmatprep.subr.mxu0 0.0
    %903 = vmatpush1.msra.mxu0 0.0
    %904 = vmatprep.subr.mxu0 0.0
    %905 = vmatpush1.msra.mxu0 0.0
    %906 = vmatprep.subr.mxu0 0.0
    %907 = vmatpush1.msra.mxu0 0.0
    %908 = vmatprep.subr.mxu0 0.0
    %909 = vmatpush1.msra.mxu0 0.0
    %910 = vmatprep.subr.mxu0 0.0
    %911 = vmatpush1.msra.mxu0 0.0
    %912 = vmatprep.subr.mxu0 0.0
    %913 = vmatpush1.msra.mxu0 0.0
    %914 = vmatprep.subr.mxu0 0.0
    %915 = vmatpush1.msra.mxu0 0.0
    %916 = vmatprep.subr.mxu0 0.0
    %917 = vmatpush1.msra.mxu0 0.0
    %918 = vmatprep.subr.mxu0 0.0
    %919 = vmatpush1.msra.mxu0 0.0
    %920 = vmatprep.subr.mxu0 0.0
    %921 = vmatpush1.msra.mxu0 0.0
    %922 = vmatprep.subr.mxu0 0.0
    %923 = vmatpush1.msra.mxu0 0.0
    %924 = vmatprep.subr.mxu0 0.0
    %925 = vmatpush1.msra.mxu0 0.0
    %926 = vmatprep.subr.mxu0 0.0
    %927 = vmatpush1.msra.mxu0 0.0
    %928 = vmatprep.mubr.f32.mxu0 0.0
    %929 = vmatmul.mubr.f32.gmra.mrb[0].mxu0 %v862
    %v930 = vpop.f32.mrb[0].mxu0
    %v931 = vadd.f32 0.0, %v930
    %v932 = vpop.f32.mrb[0].mxu0
    %933 = vdwg.mxu0
    %v934 = vsel %vm137, %v859, 0
    %936 = vmatprep.subr.mxu0 0.0
    %937 = vmatpush1.msra.mxu0 %v118
    %938 = vmatprep.subr.mxu0 0.0
    %939 = vmatpush1.msra.mxu0 %v119
    %940 = vmatprep.subr.mxu0 0.0
    %941 = vmatpush1.msra.mxu0 %v120
    %942 = vmatprep.subr.mxu0 0.0
    %943 = vmatpush1.msra.mxu0 %v121
    %944 = vmatprep.subr.mxu0 0.0
    %945 = vmatpush1.msra.mxu0 %v122
    %946 = vmatprep.subr.mxu0 0.0
    %947 = vmatpush1.msra.mxu0 %v123
    %948 = vmatprep.subr.mxu0 0.0
    %949 = vmatpush1.msra.mxu0 %v124
    %950 = vmatprep.subr.mxu0 0.0
    %951 = vmatpush1.msra.mxu0 %v125
    %952 = vmatprep.subr.mxu0 0.0
    %953 = vmatpush1.msra.mxu0 0.0
    %954 = vmatprep.subr.mxu0 0.0
    %955 = vmatpush1.msra.mxu0 0.0
    %956 = vmatprep.subr.mxu0 0.0
    %957 = vmatpush1.msra.mxu0 0.0
    %958 = vmatprep.subr.mxu0 0.0
    %959 = vmatpush1.msra.mxu0 0.0
    %960 = vmatprep.subr.mxu0 0.0
    %961 = vmatpush1.msra.mxu0 0.0
    %962 = vmatprep.subr.mxu0 0.0
    %963 = vmatpush1.msra.mxu0 0.0
    %964 = vmatprep.subr.mxu0 0.0
    %965 = vmatpush1.msra.mxu0 0.0
    %966 = vmatprep.subr.mxu0 0.0
    %967 = vmatpush1.msra.mxu0 0.0
    %968 = vmatprep.subr.mxu0 0.0
    %969 = vmatpush1.msra.mxu0 0.0
    %970 = vmatprep.subr.mxu0 0.0
    %971 = vmatpush1.msra.mxu0 0.0
    %972 = vmatprep.subr.mxu0 0.0
    %973 = vmatpush1.msra.mxu0 0.0
    %974 = vmatprep.subr.mxu0 0.0
    %975 = vmatpush1.msra.mxu0 0.0
    %976 = vmatprep.subr.mxu0 0.0
    %977 = vmatpush1.msra.mxu0 0.0
    %978 = vmatprep.subr.mxu0 0.0
    %979 = vmatpush1.msra.mxu0 0.0
    %980 = vmatprep.subr.mxu0 0.0
    %981 = vmatpush1.msra.mxu0 0.0
    %982 = vmatprep.subr.mxu0 0.0
    %983 = vmatpush1.msra.mxu0 0.0
    %984 = vmatprep.subr.mxu0 0.0
    %985 = vmatpush1.msra.mxu0 0.0
    %986 = vmatprep.subr.mxu0 0.0
    %987 = vmatpush1.msra.mxu0 0.0
    %988 = vmatprep.subr.mxu0 0.0
    %989 = vmatpush1.msra.mxu0 0.0
    %990 = vmatprep.subr.mxu0 0.0
    %991 = vmatpush1.msra.mxu0 0.0
    %992 = vmatprep.subr.mxu0 0.0
    %993 = vmatpush1.msra.mxu0 0.0
    %994 = vmatprep.subr.mxu0 0.0
    %995 = vmatpush1.msra.mxu0 0.0
    %996 = vmatprep.subr.mxu0 0.0
    %997 = vmatpush1.msra.mxu0 0.0
    %998 = vmatprep.subr.mxu0 0.0
    %999 = vmatpush1.msra.mxu0 0.0
    %1000 = vmatprep.mubr.f32.mxu0 0.0
    %1001 = vmatmul.mubr.f32.gmra.mrb[0].mxu0 %v934
    %v1002 = vpop.f32.mrb[0].mxu0
    %v1003 = vadd.f32 %v931, %v1002
    %v1004 = vpop.f32.mrb[0].mxu0
    %1005 = vdwg.mxu0
    %v1006 = vrot.slane %v859, 2
    %v1007 = vsel %vm137, %v1006, 0
    %1009 = vmatprep.subr.mxu0 0.0
    %1010 = vmatpush1.msra.mxu0 %v283
    %1011 = vmatprep.subr.mxu0 0.0
    %1012 = vmatpush1.msra.mxu0 %v284
    %1013 = vmatprep.subr.mxu0 0.0
    %1014 = vmatpush1.msra.mxu0 %v285
    %1015 = vmatprep.subr.mxu0 0.0
    %1016 = vmatpush1.msra.mxu0 %v286
    %1017 = vmatprep.subr.mxu0 0.0
    %1018 = vmatpush1.msra.mxu0 %v287
    %1019 = vmatprep.subr.mxu0 0.0
    %1020 = vmatpush1.msra.mxu0 %v288
    %1021 = vmatprep.subr.mxu0 0.0
    %1022 = vmatpush1.msra.mxu0 %v289
    %1023 = vmatprep.subr.mxu0 0.0
    %1024 = vmatpush1.msra.mxu0 %v290
    %1025 = vmatprep.subr.mxu0 0.0
    %1026 = vmatpush1.msra.mxu0 0.0
    %1027 = vmatprep.subr.mxu0 0.0
    %1028 = vmatpush1.msra.mxu0 0.0
    %1029 = vmatprep.subr.mxu0 0.0
    %1030 = vmatpush1.msra.mxu0 0.0
    %1031 = vmatprep.subr.mxu0 0.0
    %1032 = vmatpush1.msra.mxu0 0.0
    %1033 = vmatprep.subr.mxu0 0.0
    %1034 = vmatpush1.msra.mxu0 0.0
    %1035 = vmatprep.subr.mxu0 0.0
    %1036 = vmatpush1.msra.mxu0 0.0
    %1037 = vmatprep.subr.mxu0 0.0
    %1038 = vmatpush1.msra.mxu0 0.0
    %1039 = vmatprep.subr.mxu0 0.0
    %1040 = vmatpush1.msra.mxu0 0.0
    %1041 = vmatprep.subr.mxu0 0.0
    %1042 = vmatpush1.msra.mxu0 0.0
    %1043 = vmatprep.subr.mxu0 0.0
    %1044 = vmatpush1.msra.mxu0 0.0
    %1045 = vmatprep.subr.mxu0 0.0
    %1046 = vmatpush1.msra.mxu0 0.0
    %1047 = vmatprep.subr.mxu0 0.0
    %1048 = vmatpush1.msra.mxu0 0.0
    %1049 = vmatprep.subr.mxu0 0.0
    %1050 = vmatpush1.msra.mxu0 0.0
    %1051 = vmatprep.subr.mxu0 0.0
    %1052 = vmatpush1.msra.mxu0 0.0
    %1053 = vmatprep.subr.mxu0 0.0
    %1054 = vmatpush1.msra.mxu0 0.0
    %1055 = vmatprep.subr.mxu0 0.0
    %1056 = vmatpush1.msra.mxu0 0.0
    %1057 = vmatprep.subr.mxu0 0.0
    %1058 = vmatpush1.msra.mxu0 0.0
    %1059 = vmatprep.subr.mxu0 0.0
    %1060 = vmatpush1.msra.mxu0 0.0
    %1061 = vmatprep.subr.mxu0 0.0
    %1062 = vmatpush1.msra.mxu0 0.0
    %1063 = vmatprep.subr.mxu0 0.0
    %1064 = vmatpush1.msra.mxu0 0.0
    %1065 = vmatprep.subr.mxu0 0.0
    %1066 = vmatpush1.msra.mxu0 0.0
    %1067 = vmatprep.subr.mxu0 0.0
    %1068 = vmatpush1.msra.mxu0 0.0
    %1069 = vmatprep.subr.mxu0 0.0
    %1070 = vmatpush1.msra.mxu0 0.0
    %1071 = vmatprep.subr.mxu0 0.0
    %1072 = vmatpush1.msra.mxu0 0.0
    %1073 = vmatprep.mubr.f32.mxu0 0.0
    %1074 = vmatmul.mubr.f32.gmra.mrb[0].mxu0 %v1007
    %v1075 = vpop.f32.mrb[0].mxu0
    %v1076 = vadd.f32 0.0, %v1075
    %v1077 = vpop.f32.mrb[0].mxu0
    %1078 = vdwg.mxu0
    %v1079 = vadd.f32 %v1003, %v1076
    %v1080 = vrot.slane %v859, 3
    %v1081 = vsel %vm137, %v1080, 0
    %1083 = vmatprep.subr.mxu0 0.0
    %1084 = vmatpush1.msra.mxu0 %v366
    %1085 = vmatprep.subr.mxu0 0.0
    %1086 = vmatpush1.msra.mxu0 %v367
    %1087 = vmatprep.subr.mxu0 0.0
    %1088 = vmatpush1.msra.mxu0 %v368
    %1089 = vmatprep.subr.mxu0 0.0
    %1090 = vmatpush1.msra.mxu0 %v369
    %1091 = vmatprep.subr.mxu0 0.0
    %1092 = vmatpush1.msra.mxu0 %v370
    %1093 = vmatprep.subr.mxu0 0.0
    %1094 = vmatpush1.msra.mxu0 %v371
    %1095 = vmatprep.subr.mxu0 0.0
    %1096 = vmatpush1.msra.mxu0 %v372
    %1097 = vmatprep.subr.mxu0 0.0
    %1098 = vmatpush1.msra.mxu0 %v373
    %1099 = vmatprep.subr.mxu0 0.0
    %1100 = vmatpush1.msra.mxu0 0.0
    %1101 = vmatprep.subr.mxu0 0.0
    %1102 = vmatpush1.msra.mxu0 0.0
    %1103 = vmatprep.subr.mxu0 0.0
    %1104 = vmatpush1.msra.mxu0 0.0
    %1105 = vmatprep.subr.mxu0 0.0
    %1106 = vmatpush1.msra.mxu0 0.0
    %1107 = vmatprep.subr.mxu0 0.0
    %1108 = vmatpush1.msra.mxu0 0.0
    %1109 = vmatprep.subr.mxu0 0.0
    %1110 = vmatpush1.msra.mxu0 0.0
    %1111 = vmatprep.subr.mxu0 0.0
    %1112 = vmatpush1.msra.mxu0 0.0
    %1113 = vmatprep.subr.mxu0 0.0
    %1114 = vmatpush1.msra.mxu0 0.0
    %1115 = vmatprep.subr.mxu0 0.0
    %1116 = vmatpush1.msra.mxu0 0.0
    %1117 = vmatprep.subr.mxu0 0.0
    %1118 = vmatpush1.msra.mxu0 0.0
    %1119 = vmatprep.subr.mxu0 0.0
    %1120 = vmatpush1.msra.mxu0 0.0
    %1121 = vmatprep.subr.mxu0 0.0
    %1122 = vmatpush1.msra.mxu0 0.0
    %1123 = vmatprep.subr.mxu0 0.0
    %1124 = vmatpush1.msra.mxu0 0.0
    %1125 = vmatprep.subr.mxu0 0.0
    %1126 = vmatpush1.msra.mxu0 0.0
    %1127 = vmatprep.subr.mxu0 0.0
    %1128 = vmatpush1.msra.mxu0 0.0
    %1129 = vmatprep.subr.mxu0 0.0
    %1130 = vmatpush1.msra.mxu0 0.0
    %1131 = vmatprep.subr.mxu0 0.0
    %1132 = vmatpush1.msra.mxu0 0.0
    %1133 = vmatprep.subr.mxu0 0.0
    %1134 = vmatpush1.msra.mxu0 0.0
    %1135 = vmatprep.subr.mxu0 0.0
    %1136 = vmatpush1.msra.mxu0 0.0
    %1137 = vmatprep.subr.mxu0 0.0
    %1138 = vmatpush1.msra.mxu0 0.0
    %1139 = vmatprep.subr.mxu0 0.0
    %1140 = vmatpush1.msra.mxu0 0.0
    %1141 = vmatprep.subr.mxu0 0.0
    %1142 = vmatpush1.msra.mxu0 0.0
    %1143 = vmatprep.subr.mxu0 0.0
    %1144 = vmatpush1.msra.mxu0 0.0
    %1145 = vmatprep.subr.mxu0 0.0
    %1146 = vmatpush1.msra.mxu0 0.0
    %1147 = vmatprep.mubr.f32.mxu0 0.0
    %1148 = vmatmul.mubr.f32.gmra.mrb[0].mxu0 %v1081
    %v1149 = vpop.f32.mrb[0].mxu0
    %v1150 = vadd.f32 0.0, %v1149
    %v1151 = vpop.f32.mrb[0].mxu0
    %1152 = vdwg.mxu0
    %v1153 = vadd.f32 %v1079, %v1150
    %v1154 = vrot.slane %v859, 4
    %v1155 = vsel %vm137, %v1154, 0
    %1157 = vmatprep.subr.mxu0 0.0
    %1158 = vmatpush1.msra.mxu0 %v449
    %1159 = vmatprep.subr.mxu0 0.0
    %1160 = vmatpush1.msra.mxu0 %v450
    %1161 = vmatprep.subr.mxu0 0.0
    %1162 = vmatpush1.msra.mxu0 %v451
    %1163 = vmatprep.subr.mxu0 0.0
    %1164 = vmatpush1.msra.mxu0 %v452
    %1165 = vmatprep.subr.mxu0 0.0
    %1166 = vmatpush1.msra.mxu0 %v453
    %1167 = vmatprep.subr.mxu0 0.0
    %1168 = vmatpush1.msra.mxu0 %v454
    %1169 = vmatprep.subr.mxu0 0.0
    %1170 = vmatpush1.msra.mxu0 %v455
    %1171 = vmatprep.subr.mxu0 0.0
    %1172 = vmatpush1.msra.mxu0 %v456
    %1173 = vmatprep.subr.mxu0 0.0
    %1174 = vmatpush1.msra.mxu0 0.0
    %1175 = vmatprep.subr.mxu0 0.0
    %1176 = vmatpush1.msra.mxu0 0.0
    %1177 = vmatprep.subr.mxu0 0.0
    %1178 = vmatpush1.msra.mxu0 0.0
    %1179 = vmatprep.subr.mxu0 0.0
    %1180 = vmatpush1.msra.mxu0 0.0
    %1181 = vmatprep.subr.mxu0 0.0
    %1182 = vmatpush1.msra.mxu0 0.0
    %1183 = vmatprep.subr.mxu0 0.0
    %1184 = vmatpush1.msra.mxu0 0.0
    %1185 = vmatprep.subr.mxu0 0.0
    %1186 = vmatpush1.msra.mxu0 0.0
    %1187 = vmatprep.subr.mxu0 0.0
    %1188 = vmatpush1.msra.mxu0 0.0
    %1189 = vmatprep.subr.mxu0 0.0
    %1190 = vmatpush1.msra.mxu0 0.0
    %1191 = vmatprep.subr.mxu0 0.0
    %1192 = vmatpush1.msra.mxu0 0.0
    %1193 = vmatprep.subr.mxu0 0.0
    %1194 = vmatpush1.msra.mxu0 0.0
    %1195 = vmatprep.subr.mxu0 0.0
    %1196 = vmatpush1.msra.mxu0 0.0
    %1197 = vmatprep.subr.mxu0 0.0
    %1198 = vmatpush1.msra.mxu0 0.0
    %1199 = vmatprep.subr.mxu0 0.0
    %1200 = vmatpush1.msra.mxu0 0.0
    %1201 = vmatprep.subr.mxu0 0.0
    %1202 = vmatpush1.msra.mxu0 0.0
    %1203 = vmatprep.subr.mxu0 0.0
    %1204 = vmatpush1.msra.mxu0 0.0
    %1205 = vmatprep.subr.mxu0 0.0
    %1206 = vmatpush1.msra.mxu0 0.0
    %1207 = vmatprep.subr.mxu0 0.0
    %1208 = vmatpush1.msra.mxu0 0.0
    %1209 = vmatprep.subr.mxu0 0.0
    %1210 = vmatpush1.msra.mxu0 0.0
    %1211 = vmatprep.subr.mxu0 0.0
    %1212 = vmatpush1.msra.mxu0 0.0
    %1213 = vmatprep.subr.mxu0 0.0
    %1214 = vmatpush1.msra.mxu0 0.0
    %1215 = vmatprep.subr.mxu0 0.0
    %1216 = vmatpush1.msra.mxu0 0.0
    %1217 = vmatprep.subr.mxu0 0.0
    %1218 = vmatpush1.msra.mxu0 0.0
    %1219 = vmatprep.subr.mxu0 0.0
    %1220 = vmatpush1.msra.mxu0 0.0
    %1221 = vmatprep.mubr.f32.mxu0 0.0
    %1222 = vmatmul.mubr.f32.gmra.mrb[0].mxu0 %v1155
    %v1223 = vpop.f32.mrb[0].mxu0
    %v1224 = vadd.f32 0.0, %v1223
    %v1225 = vpop.f32.mrb[0].mxu0
    %1226 = vdwg.mxu0
    %v1227 = vadd.f32 %v1153, %v1224
    %v1228 = vrot.slane %v859, 5
    %v1229 = vsel %vm137, %v1228, 0
    %1231 = vmatprep.subr.mxu0 0.0
    %1232 = vmatpush1.msra.mxu0 %v532
    %1233 = vmatprep.subr.mxu0 0.0
    %1234 = vmatpush1.msra.mxu0 %v533
    %1235 = vmatprep.subr.mxu0 0.0
    %1236 = vmatpush1.msra.mxu0 %v534
    %1237 = vmatprep.subr.mxu0 0.0
    %1238 = vmatpush1.msra.mxu0 %v535
    %1239 = vmatprep.subr.mxu0 0.0
    %1240 = vmatpush1.msra.mxu0 %v536
    %1241 = vmatprep.subr.mxu0 0.0
    %1242 = vmatpush1.msra.mxu0 %v537
    %1243 = vmatprep.subr.mxu0 0.0
    %1244 = vmatpush1.msra.mxu0 %v538
    %1245 = vmatprep.subr.mxu0 0.0
    %1246 = vmatpush1.msra.mxu0 %v539
    %1247 = vmatprep.subr.mxu0 0.0
    %1248 = vmatpush1.msra.mxu0 0.0
    %1249 = vmatprep.subr.mxu0 0.0
    %1250 = vmatpush1.msra.mxu0 0.0
    %1251 = vmatprep.subr.mxu0 0.0
    %1252 = vmatpush1.msra.mxu0 0.0
    %1253 = vmatprep.subr.mxu0 0.0
    %1254 = vmatpush1.msra.mxu0 0.0
    %1255 = vmatprep.subr.mxu0 0.0
    %1256 = vmatpush1.msra.mxu0 0.0
    %1257 = vmatprep.subr.mxu0 0.0
    %1258 = vmatpush1.msra.mxu0 0.0
    %1259 = vmatprep.subr.mxu0 0.0
    %1260 = vmatpush1.msra.mxu0 0.0
    %1261 = vmatprep.subr.mxu0 0.0
    %1262 = vmatpush1.msra.mxu0 0.0
    %1263 = vmatprep.subr.mxu0 0.0
    %1264 = vmatpush1.msra.mxu0 0.0
    %1265 = vmatprep.subr.mxu0 0.0
    %1266 = vmatpush1.msra.mxu0 0.0
    %1267 = vmatprep.subr.mxu0 0.0
    %1268 = vmatpush1.msra.mxu0 0.0
    %1269 = vmatprep.subr.mxu0 0.0
    %1270 = vmatpush1.msra.mxu0 0.0
    %1271 = vmatprep.subr.mxu0 0.0
    %1272 = vmatpush1.msra.mxu0 0.0
    %1273 = vmatprep.subr.mxu0 0.0
    %1274 = vmatpush1.msra.mxu0 0.0
    %1275 = vmatprep.subr.mxu0 0.0
    %1276 = vmatpush1.msra.mxu0 0.0
    %1277 = vmatprep.subr.mxu0 0.0
    %1278 = vmatpush1.msra.mxu0 0.0
    %1279 = vmatprep.subr.mxu0 0.0
    %1280 = vmatpush1.msra.mxu0 0.0
    %1281 = vmatprep.subr.mxu0 0.0
    %1282 = vmatpush1.msra.mxu0 0.0
    %1283 = vmatprep.subr.mxu0 0.0
    %1284 = vmatpush1.msra.mxu0 0.0
    %1285 = vmatprep.subr.mxu0 0.0
    %1286 = vmatpush1.msra.mxu0 0.0
    %1287 = vmatprep.subr.mxu0 0.0
    %1288 = vmatpush1.msra.mxu0 0.0
    %1289 = vmatprep.subr.mxu0 0.0
    %1290 = vmatpush1.msra.mxu0 0.0
    %1291 = vmatprep.subr.mxu0 0.0
    %1292 = vmatpush1.msra.mxu0 0.0
    %1293 = vmatprep.subr.mxu0 0.0
    %1294 = vmatpush1.msra.mxu0 0.0
    %1295 = vmatprep.mubr.f32.mxu0 0.0
    %1296 = vmatmul.mubr.f32.gmra.mrb[0].mxu0 %v1229
    %v1297 = vpop.f32.mrb[0].mxu0
    %v1298 = vadd.f32 0.0, %v1297
    %v1299 = vpop.f32.mrb[0].mxu0
    %1300 = vdwg.mxu0
    %v1301 = vadd.f32 %v1227, %v1298
    %v1302 = vrot.slane %v859, 6
    %v1303 = vsel %vm137, %v1302, 0
    %1305 = vmatprep.subr.mxu0 0.0
    %1306 = vmatpush1.msra.mxu0 %v615
    %1307 = vmatprep.subr.mxu0 0.0
    %1308 = vmatpush1.msra.mxu0 %v616
    %1309 = vmatprep.subr.mxu0 0.0
    %1310 = vmatpush1.msra.mxu0 %v617
    %1311 = vmatprep.subr.mxu0 0.0
    %1312 = vmatpush1.msra.mxu0 %v618
    %1313 = vmatprep.subr.mxu0 0.0
    %1314 = vmatpush1.msra.mxu0 %v619
    %1315 = vmatprep.subr.mxu0 0.0
    %1316 = vmatpush1.msra.mxu0 %v620
    %1317 = vmatprep.subr.mxu0 0.0
    %1318 = vmatpush1.msra.mxu0 %v621
    %1319 = vmatprep.subr.mxu0 0.0
    %1320 = vmatpush1.msra.mxu0 %v622
    %1321 = vmatprep.subr.mxu0 0.0
    %1322 = vmatpush1.msra.mxu0 0.0
    %1323 = vmatprep.subr.mxu0 0.0
    %1324 = vmatpush1.msra.mxu0 0.0
    %1325 = vmatprep.subr.mxu0 0.0
    %1326 = vmatpush1.msra.mxu0 0.0
    %1327 = vmatprep.subr.mxu0 0.0
    %1328 = vmatpush1.msra.mxu0 0.0
    %1329 = vmatprep.subr.mxu0 0.0
    %1330 = vmatpush1.msra.mxu0 0.0
    %1331 = vmatprep.subr.mxu0 0.0
    %1332 = vmatpush1.msra.mxu0 0.0
    %1333 = vmatprep.subr.mxu0 0.0
    %1334 = vmatpush1.msra.mxu0 0.0
    %1335 = vmatprep.subr.mxu0 0.0
    %1336 = vmatpush1.msra.mxu0 0.0
    %1337 = vmatprep.subr.mxu0 0.0
    %1338 = vmatpush1.msra.mxu0 0.0
    %1339 = vmatprep.subr.mxu0 0.0
    %1340 = vmatpush1.msra.mxu0 0.0
    %1341 = vmatprep.subr.mxu0 0.0
    %1342 = vmatpush1.msra.mxu0 0.0
    %1343 = vmatprep.subr.mxu0 0.0
    %1344 = vmatpush1.msra.mxu0 0.0
    %1345 = vmatprep.subr.mxu0 0.0
    %1346 = vmatpush1.msra.mxu0 0.0
    %1347 = vmatprep.subr.mxu0 0.0
    %1348 = vmatpush1.msra.mxu0 0.0
    %1349 = vmatprep.subr.mxu0 0.0
    %1350 = vmatpush1.msra.mxu0 0.0
    %1351 = vmatprep.subr.mxu0 0.0
    %1352 = vmatpush1.msra.mxu0 0.0
    %1353 = vmatprep.subr.mxu0 0.0
    %1354 = vmatpush1.msra.mxu0 0.0
    %1355 = vmatprep.subr.mxu0 0.0
    %1356 = vmatpush1.msra.mxu0 0.0
    %1357 = vmatprep.subr.mxu0 0.0
    %1358 = vmatpush1.msra.mxu0 0.0
    %1359 = vmatprep.subr.mxu0 0.0
    %1360 = vmatpush1.msra.mxu0 0.0
    %1361 = vmatprep.subr.mxu0 0.0
    %1362 = vmatpush1.msra.mxu0 0.0
    %1363 = vmatprep.subr.mxu0 0.0
    %1364 = vmatpush1.msra.mxu0 0.0
    %1365 = vmatprep.subr.mxu0 0.0
    %1366 = vmatpush1.msra.mxu0 0.0
    %1367 = vmatprep.subr.mxu0 0.0
    %1368 = vmatpush1.msra.mxu0 0.0
    %1369 = vmatprep.mubr.f32.mxu0 0.0
    %1370 = vmatmul.mubr.f32.gmra.mrb[0].mxu0 %v1303
    %v1371 = vpop.f32.mrb[0].mxu0
    %v1372 = vadd.f32 0.0, %v1371
    %v1373 = vpop.f32.mrb[0].mxu0
    %1374 = vdwg.mxu0
    %v1375 = vadd.f32 %v1301, %v1372
    %v1376 = vrot.slane %v859, 7
    %v1377 = vsel %vm137, %v1376, 0
    %1379 = vmatprep.subr.mxu0 0.0
    %1380 = vmatpush1.msra.mxu0 %v698
    %1381 = vmatprep.subr.mxu0 0.0
    %1382 = vmatpush1.msra.mxu0 %v699
    %1383 = vmatprep.subr.mxu0 0.0
    %1384 = vmatpush1.msra.mxu0 %v700
    %1385 = vmatprep.subr.mxu0 0.0
    %1386 = vmatpush1.msra.mxu0 %v701
    %1387 = vmatprep.subr.mxu0 0.0
    %1388 = vmatpush1.msra.mxu0 %v702
    %1389 = vmatprep.subr.mxu0 0.0
    %1390 = vmatpush1.msra.mxu0 %v703
    %1391 = vmatprep.subr.mxu0 0.0
    %1392 = vmatpush1.msra.mxu0 %v704
    %1393 = vmatprep.subr.mxu0 0.0
    %1394 = vmatpush1.msra.mxu0 %v705
    %1395 = vmatprep.subr.mxu0 0.0
    %1396 = vmatpush1.msra.mxu0 0.0
    %1397 = vmatprep.subr.mxu0 0.0
    %1398 = vmatpush1.msra.mxu0 0.0
    %1399 = vmatprep.subr.mxu0 0.0
    %1400 = vmatpush1.msra.mxu0 0.0
    %1401 = vmatprep.subr.mxu0 0.0
    %1402 = vmatpush1.msra.mxu0 0.0
    %1403 = vmatprep.subr.mxu0 0.0
    %1404 = vmatpush1.msra.mxu0 0.0
    %1405 = vmatprep.subr.mxu0 0.0
    %1406 = vmatpush1.msra.mxu0 0.0
    %1407 = vmatprep.subr.mxu0 0.0
    %1408 = vmatpush1.msra.mxu0 0.0
    %1409 = vmatprep.subr.mxu0 0.0
    %1410 = vmatpush1.msra.mxu0 0.0
    %1411 = vmatprep.subr.mxu0 0.0
    %1412 = vmatpush1.msra.mxu0 0.0
    %1413 = vmatprep.subr.mxu0 0.0
    %1414 = vmatpush1.msra.mxu0 0.0
    %1415 = vmatprep.subr.mxu0 0.0
    %1416 = vmatpush1.msra.mxu0 0.0
    %1417 = vmatprep.subr.mxu0 0.0
    %1418 = vmatpush1.msra.mxu0 0.0
    %1419 = vmatprep.subr.mxu0 0.0
    %1420 = vmatpush1.msra.mxu0 0.0
    %1421 = vmatprep.subr.mxu0 0.0
    %1422 = vmatpush1.msra.mxu0 0.0
    %1423 = vmatprep.subr.mxu0 0.0
    %1424 = vmatpush1.msra.mxu0 0.0
    %1425 = vmatprep.subr.mxu0 0.0
    %1426 = vmatpush1.msra.mxu0 0.0
    %1427 = vmatprep.subr.mxu0 0.0
    %1428 = vmatpush1.msra.mxu0 0.0
    %1429 = vmatprep.subr.mxu0 0.0
    %1430 = vmatpush1.msra.mxu0 0.0
    %1431 = vmatprep.subr.mxu0 0.0
    %1432 = vmatpush1.msra.mxu0 0.0
    %1433 = vmatprep.subr.mxu0 0.0
    %1434 = vmatpush1.msra.mxu0 0.0
    %1435 = vmatprep.subr.mxu0 0.0
    %1436 = vmatpush1.msra.mxu0 0.0
    %1437 = vmatprep.subr.mxu0 0.0
    %1438 = vmatpush1.msra.mxu0 0.0
    %1439 = vmatprep.subr.mxu0 0.0
    %1440 = vmatpush1.msra.mxu0 0.0
    %1441 = vmatprep.subr.mxu0 0.0
    %1442 = vmatpush1.msra.mxu0 0.0
    %1443 = vmatprep.mubr.f32.mxu0 0.0
    %1444 = vmatmul.mubr.f32.gmra.mrb[0].mxu0 %v1377
    %v1445 = vpop.f32.mrb[0].mxu0
    %v1446 = vadd.f32 0.0, %v1445
    %v1447 = vpop.f32.mrb[0].mxu0
    %1448 = vdwg.mxu0
    %v1449 = vadd.f32 %v1375, %v1446
    %v1451 = vrot.slane %v1449, 7
    %vm1453 = vcmask 1040384
    %v1454 = vsel %vm1453, %v779, %v1451
    %v1455 = vld [vmem:[%s4] sm:$0x1]
    %v1457 = vlaneseq
    %v1458 = vshrl.u32 %v1457, 7
    %v1459 = vsub.s32 0, %v1458
    %v1460 = vrot.slane %v1455, %v1459
    %v1462 = vadd.f32 %v1454, %v1460
    %v1463 = vmax.f32 %v1462, 0.0
    %v1464 = vld [vmem:[%s5] sm:$0xff]
    %v1465 = vld [vmem:[%s5 + $0x8] sm:$0xff]
    %v1466 = vld [vmem:[%s5 + $0x10] sm:$0xff]
    %v1467 = vld [vmem:[%s5 + $0x18] sm:$0xff]
    %v1468 = vld [vmem:[%s6] sm:$0x1]
    %v1470 = vlaneseq
    %v1471 = vshrl.u32 %v1470, 7
    %v1472 = vsub.s32 0, %v1471
    %v1473 = vrot.slane %v1468, %v1472
    %vm1475 = vcmask 261120
    %v1477 = vsel %vm1475, %v1463, 0
    %1479 = vmatprep.subr.mxu0 0.0
    %1480 = vmatpush1.msra.mxu0 %v1464
    %1481 = vmatprep.subr.mxu0 0.0
    %1482 = vmatpush1.msra.mxu0 %v1465
    %1483 = vmatprep.subr.mxu0 0.0
    %1484 = vmatpush1.msra.mxu0 %v1466
    %1485 = vmatprep.subr.mxu0 0.0
    %1486 = vmatpush1.msra.mxu0 %v1467
    %1487 = vmatprep.subr.mxu0 0.0
    %1488 = vmatpush1.msra.mxu0 0.0
    %1489 = vmatprep.subr.mxu0 0.0
    %1490 = vmatpush1.msra.mxu0 0.0
    %1491 = vmatprep.subr.mxu0 0.0
    %1492 = vmatpush1.msra.mxu0 0.0
    %1493 = vmatprep.subr.mxu0 0.0
    %1494 = vmatpush1.msra.mxu0 0.0
    %1495 = vmatprep.subr.mxu0 0.0
    %1496 = vmatpush1.msra.mxu0 0.0
    %1497 = vmatprep.subr.mxu0 0.0
    %1498 = vmatpush1.msra.mxu0 0.0
    %1499 = vmatprep.subr.mxu0 0.0
    %1500 = vmatpush1.msra.mxu0 0.0
    %1501 = vmatprep.subr.mxu0 0.0
    %1502 = vmatpush1.msra.mxu0 0.0
    %1503 = vmatprep.subr.mxu0 0.0
    %1504 = vmatpush1.msra.mxu0 0.0
    %1505 = vmatprep.subr.mxu0 0.0
    %1506 = vmatpush1.msra.mxu0 0.0
    %1507 = vmatprep.subr.mxu0 0.0
    %1508 = vmatpush1.msra.mxu0 0.0
    %1509 = vmatprep.subr.mxu0 0.0
    %1510 = vmatpush1.msra.mxu0 0.0
    %1511 = vmatprep.subr.mxu0 0.0
    %1512 = vmatpush1.msra.mxu0 0.0
    %1513 = vmatprep.subr.mxu0 0.0
    %1514 = vmatpush1.msra.mxu0 0.0
    %1515 = vmatprep.subr.mxu0 0.0
    %1516 = vmatpush1.msra.mxu0 0.0
    %1517 = vmatprep.subr.mxu0 0.0
    %1518 = vmatpush1.msra.mxu0 0.0
    %1519 = vmatprep.subr.mxu0 0.0
    %1520 = vmatpush1.msra.mxu0 0.0
    %1521 = vmatprep.subr.mxu0 0.0
    %1522 = vmatpush1.msra.mxu0 0.0
    %1523 = vmatprep.subr.mxu0 0.0
    %1524 = vmatpush1.msra.mxu0 0.0
    %1525 = vmatprep.subr.mxu0 0.0
    %1526 = vmatpush1.msra.mxu0 0.0
    %1527 = vmatprep.subr.mxu0 0.0
    %1528 = vmatpush1.msra.mxu0 0.0
    %1529 = vmatprep.subr.mxu0 0.0
    %1530 = vmatpush1.msra.mxu0 0.0
    %1531 = vmatprep.subr.mxu0 0.0
    %1532 = vmatpush1.msra.mxu0 0.0
    %1533 = vmatprep.subr.mxu0 0.0
    %1534 = vmatpush1.msra.mxu0 0.0
    %1535 = vmatprep.subr.mxu0 0.0
    %1536 = vmatpush1.msra.mxu0 0.0
    %1537 = vmatprep.subr.mxu0 0.0
    %1538 = vmatpush1.msra.mxu0 0.0
    %1539 = vmatprep.subr.mxu0 0.0
    %1540 = vmatpush1.msra.mxu0 0.0
    %1541 = vmatprep.subr.mxu0 0.0
    %1542 = vmatpush1.msra.mxu0 0.0
    %1543 = vmatprep.mubr.f32.mxu0 0.0
    %1544 = vmatmul.mubr.f32.gmra.mrb[0].mxu0 %v1477
    %v1545 = vpop.f32.mrb[0].mxu0
    %v1546 = vadd.f32 %v1473, %v1545
    %v1547 = vpop.f32.mrb[0].mxu0
    %1548 = vdwg.mxu0
    %vm1549 = vcmask 41984
    %1550 = vst.msk [vmem:[#allocation2] sm:$0x3] %vm1549, %v1546
    // Predicated region
    $region30: #{plasticity_injection_forward.1} parent=1 // pred_check
      _
    $region31: #{plasticity_injection_forward.1} parent=1 // pred_check_branch
      %1552 = sbr.rel (0) target = $region33
    $region32: #{plasticity_injection_forward.1} parent=1 // pred_region
      %s1554 = ssub.s32 32, 32
      %1555 = vsyncadd [#allocation3], %s1554
      %s1557 = sshll.u32 [#allocation2], 4
      %s1558 = int_to_ptr.vmem [resolvable:$true] %s1557
      %1560 = dma.vmem_to_hbm [thread:$0]  %s1558, 32, %s7, [#allocation3]
    $region33: #{plasticity_injection_forward.1} parent=1 // pred_fallthru
      _
    // Predicated region
    $region34: #{plasticity_injection_forward.1} parent=1 // pred_check
      _
    $region35: #{plasticity_injection_forward.1} parent=1 // pred_check_branch
      %1562 = sbr.rel (0) target = $region37
    $region36: #{plasticity_injection_forward.1} parent=1 // pred_region
      %1563 = dma.done [#allocation3], 32
    $region37: #{plasticity_injection_forward.1} parent=1 // pred_fallthru
      _
    %1564 = vsyncpa [#allocation3], 1

</llo_original>
